<compile_context>
chip_gen: v5e
topology: v5e:2x2
jax: 0.10.0
libtpu: 0.0.40
codegen_flags: <defaults>
</compile_context>

<pallas_src>
import numpy as np

import jax
import jax.numpy as jnp
from jax.experimental import pallas as pl
from jax.experimental.pallas import tpu as pltpu

N_BATCH = 2
H_IN = W_IN = 7   # conv1(3x3,valid)->5x5 ; conv2(3x3,valid)->3x3 ; 3*3*16 = 144


# ---------------------------------------------------------------------------
# Kernel: five dense matmuls + ReLUs on (TB, features) slabs.
# ---------------------------------------------------------------------------
def _watermark_kernel(x_ref, w1_ref, b1_ref, w2_ref, b2_ref,
                      wf1_ref, bf1_ref, wf2_ref, bf2_ref,
                      wf3_ref, bf3_ref, out_ref):
    f32 = jnp.float32
    x = x_ref[...]                                               # (TB, 49)

    # conv1 + ReLU, fused with the conv2 im2col gather -> (TB, 1296)
    p2 = jnp.maximum(
        jnp.dot(x, w1_ref[...], preferred_element_type=f32) + b1_ref[...], 0.0)

    # conv2 (block-diagonal weight over the 9 output positions) + ReLU -> (TB, 144)
    h2 = jnp.maximum(
        jnp.dot(p2, w2_ref[...], preferred_element_type=f32) + b2_ref[...], 0.0)

    # fc1 + ReLU -> (TB, 64)
    h3 = jnp.maximum(
        jnp.dot(h2, wf1_ref[...], preferred_element_type=f32) + bf1_ref[...], 0.0)

    # fc2 + ReLU -> (TB, 32)
    h4 = jnp.maximum(
        jnp.dot(h3, wf2_ref[...], preferred_element_type=f32) + bf2_ref[...], 0.0)

    # fc3 -> (TB, 10)
    out_ref[...] = (jnp.dot(h4, wf3_ref[...], preferred_element_type=f32)
                    + bf3_ref[...])


# ---------------------------------------------------------------------------
# Trace-time glue: fold im2col / flatten permutations into the weights.
# ---------------------------------------------------------------------------
def _conv1_gather():
    """(49, 225): x flat (ih*7+iw) -> conv1 im2col patches ((r*5+s)*9 + ay*3+ax)."""
    G = np.zeros((49, 225), np.float32)
    for r in range(5):
        for s in range(5):
            for ay in range(3):
                for ax in range(3):
                    G[(r + ay) * 7 + (s + ax), (r * 5 + s) * 9 + ay * 3 + ax] = 1.0
    return G


def _conv2_gather():
    """(400, 1296): h1 flat ((ih*5+iw)*16+c) -> conv2 patches (q*144 + k*16 + c)."""
    G = np.zeros((400, 1296), np.float32)
    eye16 = np.eye(16, dtype=np.float32)
    for oh in range(3):
        for ow in range(3):
            for ky in range(3):
                for kx in range(3):
                    src = ((oh + ky) * 5 + (ow + kx)) * 16
                    dst = (oh * 3 + ow) * 144 + (ky * 3 + kx) * 16
                    G[src:src + 16, dst:dst + 16] = eye16
    return G


def _prepare_fused_params(params):
    (w1_pt, b1, w2_pt, b2, wf1_pt, bf1, wf2_pt, bf2, wf3_pt, bf3) = params
    f32 = jnp.float32

    # conv1: (16,1,3,3) -> (9,16) with row = ay*3+ax
    w1_flat = w1_pt.reshape(16, 9).T.astype(f32)
    # Block-diagonal conv1 weight over the 25 output positions: (225, 400)
    w1_big = (jnp.eye(25, dtype=f32)[:, None, :, None]
              * w1_flat[None, :, None, :]).reshape(225, 400)
    G1 = jnp.asarray(_conv1_gather())          # (49, 225)
    G2 = jnp.asarray(_conv2_gather())          # (400, 1296)
    # Fused conv1 + conv2-patch-gather weight (ReLU commutes with column dup).
    w1_fused = G1 @ w1_big @ G2                # (49, 1296)
    b1_fused = jnp.tile(b1.astype(f32), 81)    # (1296,)  layout q*144+k*16+c

    # conv2: (16,16,3,3) -> (144,16) with row = (ky*3+kx)*16 + cin
    w2_flat = jnp.transpose(w2_pt, (2, 3, 1, 0)).reshape(144, 16).astype(f32)
    # Block-diagonal over the 9 output positions: (1296, 144)
    w2_blk = (jnp.eye(9, dtype=f32)[:, None, :, None]
              * w2_flat[None, :, None, :]).reshape(1296, 144)
    b2_tile = jnp.tile(b2.astype(f32), 9)      # (144,)  layout q*16+c

    # fc1: fold the PyTorch NCHW flatten order (c*9 + oh*3 + ow) into the weight,
    # presenting it in the kernel's NHWC h2 layout (oh*48 + ow*16 + c).
    wf1_arr = jnp.transpose(wf1_pt.reshape(64, 16, 3, 3), (2, 3, 1, 0)) \
                 .reshape(144, 64).astype(f32)
    wf2_arr = wf2_pt.T.astype(f32)             # (64, 32)
    wf3_arr = wf3_pt.T.astype(f32)             # (32, 10)

    return (w1_fused, b1_fused.reshape(1, 1296),
            w2_blk, b2_tile.reshape(1, 144),
            wf1_arr, bf1.reshape(1, 64).astype(f32),
            wf2_arr, bf2.reshape(1, 32).astype(f32),
            wf3_arr, bf3.reshape(1, 10).astype(f32))


def _round_up(x, m):
    return ((x + m - 1) // m) * m


def watermark_classifier(x_nchw, params, *, block_batch=128):
    """x_nchw: (N, 1, 7, 7) float32 in the PyTorch layout."""
    n = x_nchw.shape[0]
    x_flat = x_nchw.reshape(n, H_IN * W_IN).astype(jnp.float32)   # (N, 49), h*7+w

    # Batch tile: multiple of 8 sublanes, capped at block_batch; pad batch to it.
    tb = min(_round_up(block_batch, 8), _round_up(max(n, 1), 8))
    n_pad = _round_up(n, tb)
    if n_pad != n:
        x_flat = jnp.pad(x_flat, ((0, n_pad - n), (0, 0)))

    weights = _prepare_fused_params(params)
    args = (x_flat,) + weights

    # Input / output tiled over the batch grid; weights resident (constant map).
    in_specs = [pl.BlockSpec((tb, H_IN * W_IN), lambda i: (i, 0))]
    for w in weights:
        zeros = (0,) * w.ndim
        in_specs.append(pl.BlockSpec(w.shape, lambda i, z=zeros: z))
    out_specs = pl.BlockSpec((tb, 10), lambda i: (i, 0))

    out = pl.pallas_call(
        _watermark_kernel,
        out_shape=jax.ShapeDtypeStruct((n_pad, 10), jnp.float32),
        grid=(pl.cdiv(n_pad, tb),),
        in_specs=in_specs,
        out_specs=out_specs,
        compiler_params=pltpu.CompilerParams(
            dimension_semantics=("parallel",)),
    )(*args)
    return out[:n]


# ---------------------------------------------------------------------------
# Pure-JAX reference with exact PyTorch semantics (NCHW / OIHW, valid convs).
# ---------------------------------------------------------------------------
def reference_forward(x_nchw, params):
    (w1, b1, w2, b2, wf1, bf1, wf2, bf2, wf3, bf3) = params
    dn1 = jax.lax.conv_dimension_numbers(x_nchw.shape, w1.shape,
                                         ('NCHW', 'OIHW', 'NCHW'))
    h = jax.lax.conv_general_dilated(x_nchw, w1, (1, 1), 'VALID',
                                     dimension_numbers=dn1)
    h = jax.nn.relu(h + b1[None, :, None, None])
    dn2 = jax.lax.conv_dimension_numbers(h.shape, w2.shape,
                                         ('NCHW', 'OIHW', 'NCHW'))
    h = jax.lax.conv_general_dilated(h, w2, (1, 1), 'VALID',
                                     dimension_numbers=dn2)
    h = jax.nn.relu(h + b2[None, :, None, None])
    h = h.reshape(h.shape[0], -1)                  # NCHW flatten: c*9 + h*3 + w
    h = jax.nn.relu(h @ wf1.T + bf1)
    h = jax.nn.relu(h @ wf2.T + bf2)
    return h @ wf3.T + bf3


def init_params(key):
    """Deterministic synthetic parameters in the PyTorch shapes."""
    ks = jax.random.split(key, 10)
    s = 0.1
    w1 = s * jax.random.normal(ks[0], (16, 1, 3, 3), jnp.float32)
    b1 = s * jax.random.normal(ks[1], (16,), jnp.float32)
    w2 = s * jax.random.normal(ks[2], (16, 16, 3, 3), jnp.float32)
    b2 = s * jax.random.normal(ks[3], (16,), jnp.float32)
    wf1 = s * jax.random.normal(ks[4], (64, 144), jnp.float32)
    bf1 = s * jax.random.normal(ks[5], (64,), jnp.float32)
    wf2 = s * jax.random.normal(ks[6], (32, 64), jnp.float32)
    bf2 = s * jax.random.normal(ks[7], (32,), jnp.float32)
    wf3 = s * jax.random.normal(ks[8], (10, 32), jnp.float32)
    bf3 = s * jax.random.normal(ks[9], (10,), jnp.float32)
    return (w1, b1, w2, b2, wf1, bf1, wf2, bf2, wf3, bf3)


if __name__ == "__main__":
    key = jax.random.PRNGKey(0)
    kx, kp = jax.random.split(key)
    x = jax.random.normal(kx, (N_BATCH, 1, H_IN, W_IN), jnp.float32)
    params = init_params(kp)

    out = watermark_classifier(x, params)
    out = jax.block_until_ready(out)

    ref = reference_forward(x, params)
    assert out.shape == (N_BATCH, 10), out.shape
    max_err = float(jnp.max(jnp.abs(out - ref)))
    assert max_err < 2e-3, f"mismatch vs reference: {max_err}"
    print("KERNEL_OK")
</pallas_src>

<mosaic_0001>
module attributes {stable_mosaic.version = 11 : i64} {
  func.func @_watermark_kernel(%arg0: i32, %arg1: memref<8x49xf32, #tpu.memory_space<vmem>>, %arg2: memref<49x1296xf32, #tpu.memory_space<vmem>>, %arg3: memref<1x1296xf32, #tpu.memory_space<vmem>>, %arg4: memref<1296x144xf32, #tpu.memory_space<vmem>>, %arg5: memref<1x144xf32, #tpu.memory_space<vmem>>, %arg6: memref<144x64xf32, #tpu.memory_space<vmem>>, %arg7: memref<1x64xf32, #tpu.memory_space<vmem>>, %arg8: memref<64x32xf32, #tpu.memory_space<vmem>>, %arg9: memref<1x32xf32, #tpu.memory_space<vmem>>, %arg10: memref<32x10xf32, #tpu.memory_space<vmem>>, %arg11: memref<1x10xf32, #tpu.memory_space<vmem>>, %arg12: memref<8x10xf32, #tpu.memory_space<vmem>>) attributes {dimension_semantics = [#tpu.dimension_semantics<parallel>], iteration_bounds = array<i64: 1>, scalar_prefetch = 0 : i64, scratch_operands = 0 : i64, tpu.core_type = #tpu.core_type<tc>, window_params = [{transform_indices = @transform_0, window_bounds = array<i64: 8, 49>}, {pipeline_mode = #tpu.pipeline_mode<synchronous>, transform_indices = @transform_1, window_bounds = array<i64: 49, 1296>}, {pipeline_mode = #tpu.pipeline_mode<synchronous>, transform_indices = @transform_2, window_bounds = array<i64: 1, 1296>}, {pipeline_mode = #tpu.pipeline_mode<synchronous>, transform_indices = @transform_3, window_bounds = array<i64: 1296, 144>}, {pipeline_mode = #tpu.pipeline_mode<synchronous>, transform_indices = @transform_4, window_bounds = array<i64: 1, 144>}, {pipeline_mode = #tpu.pipeline_mode<synchronous>, transform_indices = @transform_5, window_bounds = array<i64: 144, 64>}, {pipeline_mode = #tpu.pipeline_mode<synchronous>, transform_indices = @transform_6, window_bounds = array<i64: 1, 64>}, {pipeline_mode = #tpu.pipeline_mode<synchronous>, transform_indices = @transform_7, window_bounds = array<i64: 64, 32>}, {pipeline_mode = #tpu.pipeline_mode<synchronous>, transform_indices = @transform_8, window_bounds = array<i64: 1, 32>}, {pipeline_mode = #tpu.pipeline_mode<synchronous>, transform_indices = @transform_9, window_bounds = array<i64: 32, 10>}, {pipeline_mode = #tpu.pipeline_mode<synchronous>, transform_indices = @transform_10, window_bounds = array<i64: 1, 10>}, {transform_indices = @transform_11, window_bounds = array<i64: 8, 10>}]} {
    %c0 = arith.constant 0 : index
    %c0_0 = arith.constant 0 : index
    %0 = vector.load %arg1[%c0, %c0_0] : memref<8x49xf32, #tpu.memory_space<vmem>>, vector<8x49xf32>
    %c0_1 = arith.constant 0 : index
    %c0_2 = arith.constant 0 : index
    %1 = vector.load %arg2[%c0_1, %c0_2] : memref<49x1296xf32, #tpu.memory_space<vmem>>, vector<49x1296xf32>
    %cst = arith.constant dense<0.000000e+00> : vector<8x1296xf32>
    %2 = tpu.matmul %0, %1, %cst {dimension_numbers = #tpu.dot_dimension_numbers<[1], [0], [0], [1], [0, 0, 1, 1], [], []>} : vector<8x49xf32>, vector<49x1296xf32>, vector<8x1296xf32> -> vector<8x1296xf32>
    %c0_3 = arith.constant 0 : index
    %c0_4 = arith.constant 0 : index
    %3 = vector.load %arg3[%c0_3, %c0_4] : memref<1x1296xf32, #tpu.memory_space<vmem>>, vector<1x1296xf32>
    %4 = vector.broadcast %3 : vector<1x1296xf32> to vector<8x1296xf32>
    %5 = arith.addf %2, %4 : vector<8x1296xf32>
    %cst_5 = arith.constant 0.000000e+00 : f32
    %6 = vector.broadcast %cst_5 : f32 to vector<8x1296xf32>
    %7 = arith.maximumf %5, %6 : vector<8x1296xf32>
    %c0_6 = arith.constant 0 : index
    %c0_7 = arith.constant 0 : index
    %8 = vector.load %arg4[%c0_6, %c0_7] : memref<1296x144xf32, #tpu.memory_space<vmem>>, vector<1296x144xf32>
    %cst_8 = arith.constant dense<0.000000e+00> : vector<8x144xf32>
    %9 = tpu.matmul %7, %8, %cst_8 {dimension_numbers = #tpu.dot_dimension_numbers<[1], [0], [0], [1], [0, 0, 1, 1], [], []>} : vector<8x1296xf32>, vector<1296x144xf32>, vector<8x144xf32> -> vector<8x144xf32>
    %c0_9 = arith.constant 0 : index
    %c0_10 = arith.constant 0 : index
    %10 = vector.load %arg5[%c0_9, %c0_10] : memref<1x144xf32, #tpu.memory_space<vmem>>, vector<1x144xf32>
    %11 = vector.broadcast %10 : vector<1x144xf32> to vector<8x144xf32>
    %12 = arith.addf %9, %11 : vector<8x144xf32>
    %cst_11 = arith.constant 0.000000e+00 : f32
    %13 = vector.broadcast %cst_11 : f32 to vector<8x144xf32>
    %14 = arith.maximumf %12, %13 : vector<8x144xf32>
    %c0_12 = arith.constant 0 : index
    %c0_13 = arith.constant 0 : index
    %15 = vector.load %arg6[%c0_12, %c0_13] : memref<144x64xf32, #tpu.memory_space<vmem>>, vector<144x64xf32>
    %cst_14 = arith.constant dense<0.000000e+00> : vector<8x64xf32>
    %16 = tpu.matmul %14, %15, %cst_14 {dimension_numbers = #tpu.dot_dimension_numbers<[1], [0], [0], [1], [0, 0, 1, 1], [], []>} : vector<8x144xf32>, vector<144x64xf32>, vector<8x64xf32> -> vector<8x64xf32>
    %c0_15 = arith.constant 0 : index
    %c0_16 = arith.constant 0 : index
    %17 = vector.load %arg7[%c0_15, %c0_16] : memref<1x64xf32, #tpu.memory_space<vmem>>, vector<1x64xf32>
    %18 = vector.broadcast %17 : vector<1x64xf32> to vector<8x64xf32>
    %19 = arith.addf %16, %18 : vector<8x64xf32>
    %cst_17 = arith.constant 0.000000e+00 : f32
    %20 = vector.broadcast %cst_17 : f32 to vector<8x64xf32>
    %21 = arith.maximumf %19, %20 : vector<8x64xf32>
    %c0_18 = arith.constant 0 : index
    %c0_19 = arith.constant 0 : index
    %22 = vector.load %arg8[%c0_18, %c0_19] : memref<64x32xf32, #tpu.memory_space<vmem>>, vector<64x32xf32>
    %cst_20 = arith.constant dense<0.000000e+00> : vector<8x32xf32>
    %23 = tpu.matmul %21, %22, %cst_20 {dimension_numbers = #tpu.dot_dimension_numbers<[1], [0], [0], [1], [0, 0, 1, 1], [], []>} : vector<8x64xf32>, vector<64x32xf32>, vector<8x32xf32> -> vector<8x32xf32>
    %c0_21 = arith.constant 0 : index
    %c0_22 = arith.constant 0 : index
    %24 = vector.load %arg9[%c0_21, %c0_22] : memref<1x32xf32, #tpu.memory_space<vmem>>, vector<1x32xf32>
    %25 = vector.broadcast %24 : vector<1x32xf32> to vector<8x32xf32>
    %26 = arith.addf %23, %25 : vector<8x32xf32>
    %cst_23 = arith.constant 0.000000e+00 : f32
    %27 = vector.broadcast %cst_23 : f32 to vector<8x32xf32>
    %28 = arith.maximumf %26, %27 : vector<8x32xf32>
    %c0_24 = arith.constant 0 : index
    %c0_25 = arith.constant 0 : index
    %29 = vector.load %arg10[%c0_24, %c0_25] : memref<32x10xf32, #tpu.memory_space<vmem>>, vector<32x10xf32>
    %cst_26 = arith.constant dense<0.000000e+00> : vector<8x10xf32>
    %30 = tpu.matmul %28, %29, %cst_26 {dimension_numbers = #tpu.dot_dimension_numbers<[1], [0], [0], [1], [0, 0, 1, 1], [], []>} : vector<8x32xf32>, vector<32x10xf32>, vector<8x10xf32> -> vector<8x10xf32>
    %c0_27 = arith.constant 0 : index
    %c0_28 = arith.constant 0 : index
    %31 = vector.load %arg11[%c0_27, %c0_28] : memref<1x10xf32, #tpu.memory_space<vmem>>, vector<1x10xf32>
    %32 = vector.broadcast %31 : vector<1x10xf32> to vector<8x10xf32>
    %33 = arith.addf %30, %32 : vector<8x10xf32>
    %c0_29 = arith.constant 0 : index
    %c0_30 = arith.constant 0 : index
    %34 = vector.load %arg12[%c0_29, %c0_30] : memref<8x10xf32, #tpu.memory_space<vmem>>, vector<8x10xf32>
    tpu.vector_store %arg12[%c0_29, %c0_30], %33 {strides = array<i32>} : memref<8x10xf32, #tpu.memory_space<vmem>>, vector<8x10xf32>,
    return
  }
  func.func @transform_0(%arg0: i32) -> (i32, i32) {
    %c0_i32 = arith.constant 0 : i32
    %c0_i32_0 = arith.constant 0 : i32
    return %arg0, %c0_i32 : i32, i32
  }
  func.func @transform_1(%arg0: i32) -> (i32, i32) {
    %c0_i32 = arith.constant 0 : i32
    %c0_i32_0 = arith.constant 0 : i32
    %c0_i32_1 = arith.constant 0 : i32
    return %c0_i32, %c0_i32_0 : i32, i32
  }
  func.func @transform_2(%arg0: i32) -> (i32, i32) {
    %c0_i32 = arith.constant 0 : i32
    %c0_i32_0 = arith.constant 0 : i32
    %c0_i32_1 = arith.constant 0 : i32
    return %c0_i32, %c0_i32_0 : i32, i32
  }
  func.func @transform_3(%arg0: i32) -> (i32, i32) {
    %c0_i32 = arith.constant 0 : i32
    %c0_i32_0 = arith.constant 0 : i32
    %c0_i32_1 = arith.constant 0 : i32
    return %c0_i32, %c0_i32_0 : i32, i32
  }
  func.func @transform_4(%arg0: i32) -> (i32, i32) {
    %c0_i32 = arith.constant 0 : i32
    %c0_i32_0 = arith.constant 0 : i32
    %c0_i32_1 = arith.constant 0 : i32
    return %c0_i32, %c0_i32_0 : i32, i32
  }
  func.func @transform_5(%arg0: i32) -> (i32, i32) {
    %c0_i32 = arith.constant 0 : i32
    %c0_i32_0 = arith.constant 0 : i32
    %c0_i32_1 = arith.constant 0 : i32
    return %c0_i32, %c0_i32_0 : i32, i32
  }
  func.func @transform_6(%arg0: i32) -> (i32, i32) {
    %c0_i32 = arith.constant 0 : i32
    %c0_i32_0 = arith.constant 0 : i32
    %c0_i32_1 = arith.constant 0 : i32
    return %c0_i32, %c0_i32_0 : i32, i32
  }
  func.func @transform_7(%arg0: i32) -> (i32, i32) {
    %c0_i32 = arith.constant 0 : i32
    %c0_i32_0 = arith.constant 0 : i32
    %c0_i32_1 = arith.constant 0 : i32
    return %c0_i32, %c0_i32_0 : i32, i32
  }
  func.func @transform_8(%arg0: i32) -> (i32, i32) {
    %c0_i32 = arith.constant 0 : i32
    %c0_i32_0 = arith.constant 0 : i32
    %c0_i32_1 = arith.constant 0 : i32
    return %c0_i32, %c0_i32_0 : i32, i32
  }
  func.func @transform_9(%arg0: i32) -> (i32, i32) {
    %c0_i32 = arith.constant 0 : i32
    %c0_i32_0 = arith.constant 0 : i32
    %c0_i32_1 = arith.constant 0 : i32
    return %c0_i32, %c0_i32_0 : i32, i32
  }
  func.func @transform_10(%arg0: i32) -> (i32, i32) {
    %c0_i32 = arith.constant 0 : i32
    %c0_i32_0 = arith.constant 0 : i32
    %c0_i32_1 = arith.constant 0 : i32
    return %c0_i32, %c0_i32_0 : i32, i32
  }
  func.func @transform_11(%arg0: i32) -> (i32, i32) {
    %c0_i32 = arith.constant 0 : i32
    %c0_i32_0 = arith.constant 0 : i32
    return %arg0, %c0_i32 : i32, i32
  }
}

</mosaic_0001>

<llo_original>
// kernel: tpu_custom_call.1
$region0: #{tpu_custom_call.1}
  #allocation0 [shape = 'u32[]', space=smem, size = 0x4, offset = 0x4, fixed_abs, tag = 'smem constant byte address 0x4 - core index']
  #allocation1 [shape = 'u32[72,128]{1,0:T(1,128)}', space=vmem, size = 0x9000, scoped, tag = 'internal scratch']
  %s0 = inlined_call_operand.vmem [shape: f32[8,49], index: 0, kind: input, shape index: {}]
  %s1 = inlined_call_operand.vmem [shape: f32[49,1296], index: 1, kind: input, shape index: {}]
  %s2 = inlined_call_operand.vmem [shape: f32[1,1296], index: 2, kind: input, shape index: {}]
  %s3 = inlined_call_operand.vmem [shape: f32[1296,144], index: 3, kind: input, shape index: {}]
  %s4 = inlined_call_operand.vmem [shape: f32[1,144], index: 4, kind: input, shape index: {}]
  %s5 = inlined_call_operand.vmem [shape: f32[144,64], index: 5, kind: input, shape index: {}]
  %s6 = inlined_call_operand.vmem [shape: f32[1,64], index: 6, kind: input, shape index: {}]
  %s7 = inlined_call_operand.vmem [shape: f32[64,32], index: 7, kind: input, shape index: {}]
  %s8 = inlined_call_operand.vmem [shape: f32[1,32], index: 8, kind: input, shape index: {}]
  %s9 = inlined_call_operand.vmem [shape: f32[32,10], index: 9, kind: input, shape index: {}]
  %s10 = inlined_call_operand.vmem [shape: f32[1,10], index: 10, kind: input, shape index: {}]
  %s11 = inlined_call_operand.hbm [shape: f32[8,10], index: 11, kind: output, shape index: {}]
  %s12 = sld [smem:[#allocation0]]
  $region54: #{tpu_custom_call.1} parent=0
    _
  %s14 = ssub.s32 1, %s12
  %s15 = scalar_select 0, %s14, %s12
  $region1: #{tpu_custom_call.1} parent=0
    #allocation2 [shape = 'u8[4096]{0}', space=vmem, size = 0x1000, scoped, tag = 'output window, operand 0, single buffered']
    #allocation3 [shape = 's32[1]{0}', space=sflag, size = 0x4, scoped, tag = 'scoped memory for tpu_custom_call.1']
    %16 = vsyncpa [#allocation3], 0
    // Predicated region
    $region2: #{tpu_custom_call.1} parent=1 // pred_check
      _
    $region3: #{tpu_custom_call.1} parent=1 // pred_check_branch
      %18 = sbr.rel (0) target = $region5
    $region4: #{tpu_custom_call.1} parent=1 // pred_region
      _
    $region5: #{tpu_custom_call.1} parent=1 // pred_fallthru
      _
    // Predicated region
    $region6: #{tpu_custom_call.1} parent=1 // pred_check
      _
    $region7: #{tpu_custom_call.1} parent=1 // pred_check_branch
      %20 = sbr.rel (0) target = $region9
    $region8: #{tpu_custom_call.1} parent=1 // pred_region
      _
    $region9: #{tpu_custom_call.1} parent=1 // pred_fallthru
      _
    // Predicated region
    $region10: #{tpu_custom_call.1} parent=1 // pred_check
      _
    $region11: #{tpu_custom_call.1} parent=1 // pred_check_branch
      %22 = sbr.rel (0) target = $region13
    $region12: #{tpu_custom_call.1} parent=1 // pred_region
      _
    $region13: #{tpu_custom_call.1} parent=1 // pred_fallthru
      _
    // Predicated region
    $region14: #{tpu_custom_call.1} parent=1 // pred_check
      _
    $region15: #{tpu_custom_call.1} parent=1 // pred_check_branch
      %24 = sbr.rel (0) target = $region17
    $region16: #{tpu_custom_call.1} parent=1 // pred_region
      _
    $region17: #{tpu_custom_call.1} parent=1 // pred_fallthru
      _
    // Predicated region
    $region18: #{tpu_custom_call.1} parent=1 // pred_check
      _
    $region19: #{tpu_custom_call.1} parent=1 // pred_check_branch
      %26 = sbr.rel (0) target = $region21
    $region20: #{tpu_custom_call.1} parent=1 // pred_region
      _
    $region21: #{tpu_custom_call.1} parent=1 // pred_fallthru
      _
    // Predicated region
    $region22: #{tpu_custom_call.1} parent=1 // pred_check
      _
    $region23: #{tpu_custom_call.1} parent=1 // pred_check_branch
      %28 = sbr.rel (0) target = $region25
    $region24: #{tpu_custom_call.1} parent=1 // pred_region
      _
    $region25: #{tpu_custom_call.1} parent=1 // pred_fallthru
      _
    // Predicated region
    $region26: #{tpu_custom_call.1} parent=1 // pred_check
      _
    $region27: #{tpu_custom_call.1} parent=1 // pred_check_branch
      %30 = sbr.rel (0) target = $region29
    $region28: #{tpu_custom_call.1} parent=1 // pred_region
      _
    $region29: #{tpu_custom_call.1} parent=1 // pred_fallthru
      _
    // Predicated region
    $region30: #{tpu_custom_call.1} parent=1 // pred_check
      _
    $region31: #{tpu_custom_call.1} parent=1 // pred_check_branch
      %32 = sbr.rel (0) target = $region33
    $region32: #{tpu_custom_call.1} parent=1 // pred_region
      _
    $region33: #{tpu_custom_call.1} parent=1 // pred_fallthru
      _
    // Predicated region
    $region34: #{tpu_custom_call.1} parent=1 // pred_check
      _
    $region35: #{tpu_custom_call.1} parent=1 // pred_check_branch
      %34 = sbr.rel (0) target = $region37
    $region36: #{tpu_custom_call.1} parent=1 // pred_region
      _
    $region37: #{tpu_custom_call.1} parent=1 // pred_fallthru
      _
    // Predicated region
    $region38: #{tpu_custom_call.1} parent=1 // pred_check
      _
    $region39: #{tpu_custom_call.1} parent=1 // pred_check_branch
      %36 = sbr.rel (0) target = $region41
    $region40: #{tpu_custom_call.1} parent=1 // pred_region
      _
    $region41: #{tpu_custom_call.1} parent=1 // pred_fallthru
      _
    // Predicated region
    $region42: #{tpu_custom_call.1} parent=1 // pred_check
      _
    $region43: #{tpu_custom_call.1} parent=1 // pred_check_branch
      %38 = sbr.rel (0) target = $region45
    $region44: #{tpu_custom_call.1} parent=1 // pred_region
      _
    $region45: #{tpu_custom_call.1} parent=1 // pred_fallthru
      _
    %v39 = vld [vmem:[%s0] sm:$0xff]
    %v40 = vld [vmem:[%s1] sm:$0xff]
    %v41 = vld [vmem:[%s1 + $0x8] sm:$0xff]
    %v42 = vld [vmem:[%s1 + $0x10] sm:$0xff]
    %v43 = vld [vmem:[%s1 + $0x18] sm:$0xff]
    %v44 = vld [vmem:[%s1 + $0x20] sm:$0xff]
    %v45 = vld [vmem:[%s1 + $0x28] sm:$0xff]
    %v46 = vld [vmem:[%s1 + $0x30] sm:$0xff]
    %v47 = vld [vmem:[%s1 + $0x38] sm:$0xff]
    %v48 = vld [vmem:[%s1 + $0x40] sm:$0xff]
    %v49 = vld [vmem:[%s1 + $0x48] sm:$0xff]
    %v50 = vld [vmem:[%s1 + $0x50] sm:$0xff]
    %v51 = vld [vmem:[%s1 + $0x58] sm:$0xff]
    %v52 = vld [vmem:[%s1 + $0x60] sm:$0xff]
    %v53 = vld [vmem:[%s1 + $0x68] sm:$0xff]
    %v54 = vld [vmem:[%s1 + $0x70] sm:$0xff]
    %v55 = vld [vmem:[%s1 + $0x78] sm:$0xff]
    %v56 = vld [vmem:[%s1 + $0x80] sm:$0xff]
    %v57 = vld [vmem:[%s1 + $0x88] sm:$0xff]
    %v58 = vld [vmem:[%s1 + $0x90] sm:$0xff]
    %v59 = vld [vmem:[%s1 + $0x98] sm:$0xff]
    %v60 = vld [vmem:[%s1 + $0xa0] sm:$0xff]
    %v61 = vld [vmem:[%s1 + $0xa8] sm:$0xff]
    %v62 = vld [vmem:[%s1 + $0xb0] sm:$0xff]
    %v63 = vld [vmem:[%s1 + $0xb8] sm:$0xff]
    %v64 = vld [vmem:[%s1 + $0xc0] sm:$0xff]
    %v65 = vld [vmem:[%s1 + $0xc8] sm:$0xff]
    %v66 = vld [vmem:[%s1 + $0xd0] sm:$0xff]
    %v67 = vld [vmem:[%s1 + $0xd8] sm:$0xff]
    %v68 = vld [vmem:[%s1 + $0xe0] sm:$0xff]
    %v69 = vld [vmem:[%s1 + $0xe8] sm:$0xff]
    %v70 = vld [vmem:[%s1 + $0xf0] sm:$0xff]
    %v71 = vld [vmem:[%s1 + $0xf8] sm:$0xff]
    %v72 = vld [vmem:[%s1 + $0x100] sm:$0xff]
    %v73 = vld [vmem:[%s1 + $0x108] sm:$0xff]
    %v74 = vld [vmem:[%s1 + $0x110] sm:$0xff]
    %v75 = vld [vmem:[%s1 + $0x118] sm:$0xff]
    %v76 = vld [vmem:[%s1 + $0x120] sm:$0xff]
    %v77 = vld [vmem:[%s1 + $0x128] sm:$0xff]
    %v78 = vld [vmem:[%s1 + $0x130] sm:$0xff]
    %v79 = vld [vmem:[%s1 + $0x138] sm:$0xff]
    %v80 = vld [vmem:[%s1 + $0x140] sm:$0xff]
    %v81 = vld [vmem:[%s1 + $0x148] sm:$0xff]
    %v82 = vld [vmem:[%s1 + $0x150] sm:$0xff]
    %v83 = vld [vmem:[%s1 + $0x158] sm:$0xff]
    %v84 = vld [vmem:[%s1 + $0x160] sm:$0xff]
    %v85 = vld [vmem:[%s1 + $0x168] sm:$0xff]
    %v86 = vld [vmem:[%s1 + $0x170] sm:$0xff]
    %v87 = vld [vmem:[%s1 + $0x178] sm:$0xff]
    %v88 = vld [vmem:[%s1 + $0x180] sm:$0xff]
    %v89 = vld [vmem:[%s1 + $0x188] sm:$0xff]
    %v90 = vld [vmem:[%s1 + $0x190] sm:$0xff]
    %v91 = vld [vmem:[%s1 + $0x198] sm:$0xff]
    %v92 = vld [vmem:[%s1 + $0x1a0] sm:$0xff]
    %v93 = vld [vmem:[%s1 + $0x1a8] sm:$0xff]
    %v94 = vld [vmem:[%s1 + $0x1b0] sm:$0xff]
    %v95 = vld [vmem:[%s1 + $0x1b8] sm:$0xff]
    %v96 = vld [vmem:[%s1 + $0x1c0] sm:$0xff]
    %v97 = vld [vmem:[%s1 + $0x1c8] sm:$0xff]
    %v98 = vld [vmem:[%s1 + $0x1d0] sm:$0xff]
    %v99 = vld [vmem:[%s1 + $0x1d8] sm:$0xff]
    %v100 = vld [vmem:[%s1 + $0x1e0] sm:$0xff]
    %v101 = vld [vmem:[%s1 + $0x1e8] sm:$0xff]
    %v102 = vld [vmem:[%s1 + $0x1f0] sm:$0xff]
    %v103 = vld [vmem:[%s1 + $0x1f8] sm:$0xff]
    %v104 = vld [vmem:[%s1 + $0x200] sm:$0xff]
    %v105 = vld [vmem:[%s1 + $0x208] sm:$0xff]
    %v106 = vld [vmem:[%s1 + $0x210] sm:$0x1]
    %v107 = vld [vmem:[%s1 + $0x218] sm:$0x1]
    %v108 = vld [vmem:[%s1 + $0x220] sm:$0x1]
    %v109 = vld [vmem:[%s1 + $0x228] sm:$0x1]
    %v110 = vld [vmem:[%s1 + $0x230] sm:$0x1]
    %v111 = vld [vmem:[%s1 + $0x238] sm:$0x1]
    %v112 = vld [vmem:[%s1 + $0x240] sm:$0x1]
    %v113 = vld [vmem:[%s1 + $0x248] sm:$0x1]
    %v114 = vld [vmem:[%s1 + $0x250] sm:$0x1]
    %v115 = vld [vmem:[%s1 + $0x258] sm:$0x1]
    %v116 = vld [vmem:[%s1 + $0x260] sm:$0x1]
    %v117 = vld [vmem:[%s2] sm:$0xff]
    %v118 = vld [vmem:[%s2 + $0x8] sm:$0x7]
    %v121 = vperm.slane %v117, 0
    %v122 = vperm.slane %v117, 1
    %v123 = vperm.slane %v117, 2
    %v124 = vperm.slane %v117, 3
    %v125 = vperm.slane %v117, 4
    %v126 = vperm.slane %v117, 5
    %v127 = vperm.slane %v117, 6
    %v128 = vperm.slane %v117, 7
    %v129 = vperm.slane %v118, 0
    %v130 = vperm.slane %v118, 1
    %v131 = vperm.slane %v118, 2
    %vm143 = vcmask 400384
    %v145 = vsel %vm143, %v39, 0
    %vm147 = vcmask 1040384
    %v149 = vsel %vm147, %v106, 0
    %v152 = vsel %vm147, %v107, 0
    %v155 = vsel %vm147, %v108, 0
    %v158 = vsel %vm147, %v109, 0
    %v161 = vsel %vm147, %v110, 0
    %v164 = vsel %vm147, %v111, 0
    %v167 = vsel %vm147, %v112, 0
    %v170 = vsel %vm147, %v113, 0
    %v173 = vsel %vm147, %v114, 0
    %v176 = vsel %vm147, %v115, 0
    %v179 = vsel %vm147, %v116, 0
    %181 = vmatpush.msra.mxu0 0.0
    %182 = vmatpush.msra.mxu0 0.0
    %183 = vmatpush.msra.mxu0 0.0
    %184 = vmatpush.msra.mxu0 0.0
    %185 = vmatpush.msra.mxu0 0.0
    %186 = vmatpush.msra.mxu0 0.0
    %187 = vmatpush.msra.mxu0 0.0
    %188 = vmatpush.msra.mxu0 0.0
    %189 = vmatpush.msra.mxu0 0.0
    %190 = vmatpush.msra.mxu0 %v149
    %191 = vmatpush.msra.mxu0 %v95
    %192 = vmatpush.msra.mxu0 %v84
    %193 = vmatpush.msra.mxu0 %v73
    %194 = vmatpush.msra.mxu0 %v62
    %195 = vmatpush.msra.mxu0 %v51
    %196 = vmatpush.msra.mxu0 %v40
    %197 = vmatmul.f32.gmra.mxu0 %v145
    %v198 = vpop.f32.mrf.mxu0
    %v199 = vadd.f32 %v121, %v198
    %200 = vdwg.mxu0
    %201 = vmatpush.msra.mxu0 0.0
    %202 = vmatpush.msra.mxu0 0.0
    %203 = vmatpush.msra.mxu0 0.0
    %204 = vmatpush.msra.mxu0 0.0
    %205 = vmatpush.msra.mxu0 0.0
    %206 = vmatpush.msra.mxu0 0.0
    %207 = vmatpush.msra.mxu0 0.0
    %208 = vmatpush.msra.mxu0 0.0
    %209 = vmatpush.msra.mxu0 0.0
    %210 = vmatpush.msra.mxu0 %v152
    %211 = vmatpush.msra.mxu0 %v96
    %212 = vmatpush.msra.mxu0 %v85
    %213 = vmatpush.msra.mxu0 %v74
    %214 = vmatpush.msra.mxu0 %v63
    %215 = vmatpush.msra.mxu0 %v52
    %216 = vmatpush.msra.mxu0 %v41
    %217 = vmatmul.f32.gmra.mxu0 %v145
    %v218 = vpop.f32.mrf.mxu0
    %v219 = vadd.f32 %v122, %v218
    %220 = vdwg.mxu0
    %221 = vmatpush.msra.mxu0 0.0
    %222 = vmatpush.msra.mxu0 0.0
    %223 = vmatpush.msra.mxu0 0.0
    %224 = vmatpush.msra.mxu0 0.0
    %225 = vmatpush.msra.mxu0 0.0
    %226 = vmatpush.msra.mxu0 0.0
    %227 = vmatpush.msra.mxu0 0.0
    %228 = vmatpush.msra.mxu0 0.0
    %229 = vmatpush.msra.mxu0 0.0
    %230 = vmatpush.msra.mxu0 %v155
    %231 = vmatpush.msra.mxu0 %v97
    %232 = vmatpush.msra.mxu0 %v86
    %233 = vmatpush.msra.mxu0 %v75
    %234 = vmatpush.msra.mxu0 %v64
    %235 = vmatpush.msra.mxu0 %v53
    %236 = vmatpush.msra.mxu0 %v42
    %237 = vmatmul.f32.gmra.mxu0 %v145
    %v238 = vpop.f32.mrf.mxu0
    %v239 = vadd.f32 %v123, %v238
    %240 = vdwg.mxu0
    %241 = vmatpush.msra.mxu0 0.0
    %242 = vmatpush.msra.mxu0 0.0
    %243 = vmatpush.msra.mxu0 0.0
    %244 = vmatpush.msra.mxu0 0.0
    %245 = vmatpush.msra.mxu0 0.0
    %246 = vmatpush.msra.mxu0 0.0
    %247 = vmatpush.msra.mxu0 0.0
    %248 = vmatpush.msra.mxu0 0.0
    %249 = vmatpush.msra.mxu0 0.0
    %250 = vmatpush.msra.mxu0 %v158
    %251 = vmatpush.msra.mxu0 %v98
    %252 = vmatpush.msra.mxu0 %v87
    %253 = vmatpush.msra.mxu0 %v76
    %254 = vmatpush.msra.mxu0 %v65
    %255 = vmatpush.msra.mxu0 %v54
    %256 = vmatpush.msra.mxu0 %v43
    %257 = vmatmul.f32.gmra.mxu0 %v145
    %v258 = vpop.f32.mrf.mxu0
    %v259 = vadd.f32 %v124, %v258
    %260 = vdwg.mxu0
    %261 = vmatpush.msra.mxu0 0.0
    %262 = vmatpush.msra.mxu0 0.0
    %263 = vmatpush.msra.mxu0 0.0
    %264 = vmatpush.msra.mxu0 0.0
    %265 = vmatpush.msra.mxu0 0.0
    %266 = vmatpush.msra.mxu0 0.0
    %267 = vmatpush.msra.mxu0 0.0
    %268 = vmatpush.msra.mxu0 0.0
    %269 = vmatpush.msra.mxu0 0.0
    %270 = vmatpush.msra.mxu0 %v161
    %271 = vmatpush.msra.mxu0 %v99
    %272 = vmatpush.msra.mxu0 %v88
    %273 = vmatpush.msra.mxu0 %v77
    %274 = vmatpush.msra.mxu0 %v66
    %275 = vmatpush.msra.mxu0 %v55
    %276 = vmatpush.msra.mxu0 %v44
    %277 = vmatmul.f32.gmra.mxu0 %v145
    %v278 = vpop.f32.mrf.mxu0
    %v279 = vadd.f32 %v125, %v278
    %280 = vdwg.mxu0
    %281 = vmatpush.msra.mxu0 0.0
    %282 = vmatpush.msra.mxu0 0.0
    %283 = vmatpush.msra.mxu0 0.0
    %284 = vmatpush.msra.mxu0 0.0
    %285 = vmatpush.msra.mxu0 0.0
    %286 = vmatpush.msra.mxu0 0.0
    %287 = vmatpush.msra.mxu0 0.0
    %288 = vmatpush.msra.mxu0 0.0
    %289 = vmatpush.msra.mxu0 0.0
    %290 = vmatpush.msra.mxu0 %v164
    %291 = vmatpush.msra.mxu0 %v100
    %292 = vmatpush.msra.mxu0 %v89
    %293 = vmatpush.msra.mxu0 %v78
    %294 = vmatpush.msra.mxu0 %v67
    %295 = vmatpush.msra.mxu0 %v56
    %296 = vmatpush.msra.mxu0 %v45
    %297 = vmatmul.f32.gmra.mxu0 %v145
    %v298 = vpop.f32.mrf.mxu0
    %v299 = vadd.f32 %v126, %v298
    %300 = vdwg.mxu0
    %301 = vmatpush.msra.mxu0 0.0
    %302 = vmatpush.msra.mxu0 0.0
    %303 = vmatpush.msra.mxu0 0.0
    %304 = vmatpush.msra.mxu0 0.0
    %305 = vmatpush.msra.mxu0 0.0
    %306 = vmatpush.msra.mxu0 0.0
    %307 = vmatpush.msra.mxu0 0.0
    %308 = vmatpush.msra.mxu0 0.0
    %309 = vmatpush.msra.mxu0 0.0
    %310 = vmatpush.msra.mxu0 %v167
    %311 = vmatpush.msra.mxu0 %v101
    %312 = vmatpush.msra.mxu0 %v90
    %313 = vmatpush.msra.mxu0 %v79
    %314 = vmatpush.msra.mxu0 %v68
    %315 = vmatpush.msra.mxu0 %v57
    %316 = vmatpush.msra.mxu0 %v46
    %317 = vmatmul.f32.gmra.mxu0 %v145
    %v318 = vpop.f32.mrf.mxu0
    %v319 = vadd.f32 %v127, %v318
    %320 = vdwg.mxu0
    %321 = vmatpush.msra.mxu0 0.0
    %322 = vmatpush.msra.mxu0 0.0
    %323 = vmatpush.msra.mxu0 0.0
    %324 = vmatpush.msra.mxu0 0.0
    %325 = vmatpush.msra.mxu0 0.0
    %326 = vmatpush.msra.mxu0 0.0
    %327 = vmatpush.msra.mxu0 0.0
    %328 = vmatpush.msra.mxu0 0.0
    %329 = vmatpush.msra.mxu0 0.0
    %330 = vmatpush.msra.mxu0 %v170
    %331 = vmatpush.msra.mxu0 %v102
    %332 = vmatpush.msra.mxu0 %v91
    %333 = vmatpush.msra.mxu0 %v80
    %334 = vmatpush.msra.mxu0 %v69
    %335 = vmatpush.msra.mxu0 %v58
    %336 = vmatpush.msra.mxu0 %v47
    %337 = vmatmul.f32.gmra.mxu0 %v145
    %v338 = vpop.f32.mrf.mxu0
    %v339 = vadd.f32 %v128, %v338
    %340 = vdwg.mxu0
    %341 = vmatpush.msra.mxu0 0.0
    %342 = vmatpush.msra.mxu0 0.0
    %343 = vmatpush.msra.mxu0 0.0
    %344 = vmatpush.msra.mxu0 0.0
    %345 = vmatpush.msra.mxu0 0.0
    %346 = vmatpush.msra.mxu0 0.0
    %347 = vmatpush.msra.mxu0 0.0
    %348 = vmatpush.msra.mxu0 0.0
    %349 = vmatpush.msra.mxu0 0.0
    %350 = vmatpush.msra.mxu0 %v173
    %351 = vmatpush.msra.mxu0 %v103
    %352 = vmatpush.msra.mxu0 %v92
    %353 = vmatpush.msra.mxu0 %v81
    %354 = vmatpush.msra.mxu0 %v70
    %355 = vmatpush.msra.mxu0 %v59
    %356 = vmatpush.msra.mxu0 %v48
    %357 = vmatmul.f32.gmra.mxu0 %v145
    %v358 = vpop.f32.mrf.mxu0
    %v359 = vadd.f32 %v129, %v358
    %360 = vdwg.mxu0
    %361 = vmatpush.msra.mxu0 0.0
    %362 = vmatpush.msra.mxu0 0.0
    %363 = vmatpush.msra.mxu0 0.0
    %364 = vmatpush.msra.mxu0 0.0
    %365 = vmatpush.msra.mxu0 0.0
    %366 = vmatpush.msra.mxu0 0.0
    %367 = vmatpush.msra.mxu0 0.0
    %368 = vmatpush.msra.mxu0 0.0
    %369 = vmatpush.msra.mxu0 0.0
    %370 = vmatpush.msra.mxu0 %v176
    %371 = vmatpush.msra.mxu0 %v104
    %372 = vmatpush.msra.mxu0 %v93
    %373 = vmatpush.msra.mxu0 %v82
    %374 = vmatpush.msra.mxu0 %v71
    %375 = vmatpush.msra.mxu0 %v60
    %376 = vmatpush.msra.mxu0 %v49
    %377 = vmatmul.f32.gmra.mxu0 %v145
    %v378 = vpop.f32.mrf.mxu0
    %v379 = vadd.f32 %v130, %v378
    %380 = vdwg.mxu0
    %381 = vmatpush.msra.mxu0 0.0
    %382 = vmatpush.msra.mxu0 0.0
    %383 = vmatpush.msra.mxu0 0.0
    %384 = vmatpush.msra.mxu0 0.0
    %385 = vmatpush.msra.mxu0 0.0
    %386 = vmatpush.msra.mxu0 0.0
    %387 = vmatpush.msra.mxu0 0.0
    %388 = vmatpush.msra.mxu0 0.0
    %389 = vmatpush.msra.mxu0 0.0
    %390 = vmatpush.msra.mxu0 %v179
    %391 = vmatpush.msra.mxu0 %v105
    %392 = vmatpush.msra.mxu0 %v94
    %393 = vmatpush.msra.mxu0 %v83
    %394 = vmatpush.msra.mxu0 %v72
    %395 = vmatpush.msra.mxu0 %v61
    %396 = vmatpush.msra.mxu0 %v50
    %397 = vmatmul.f32.gmra.mxu0 %v145
    %v398 = vpop.f32.mrf.mxu0
    %v399 = vadd.f32 %v131, %v398
    %400 = vdwg.mxu0
    %v401 = vmax.f32 %v199, 0.0
    %v402 = vmax.f32 %v219, 0.0
    %v403 = vmax.f32 %v239, 0.0
    %v404 = vmax.f32 %v259, 0.0
    %v405 = vmax.f32 %v279, 0.0
    %v406 = vmax.f32 %v299, 0.0
    %v407 = vmax.f32 %v319, 0.0
    %v408 = vmax.f32 %v339, 0.0
    %v409 = vmax.f32 %v359, 0.0
    %v410 = vmax.f32 %v379, 0.0
    %v411 = vmax.f32 %v399, 0.0
    %v412 = vld [vmem:[%s3] sm:$0xff]
    %v413 = vld [vmem:[%s3 + $0x8] sm:$0xff]
    %v414 = vld [vmem:[%s3 + $0x10] sm:$0xff]
    %v415 = vld [vmem:[%s3 + $0x18] sm:$0xff]
    %v416 = vld [vmem:[%s3 + $0x20] sm:$0xff]
    %v417 = vld [vmem:[%s3 + $0x28] sm:$0xff]
    %v418 = vld [vmem:[%s3 + $0x30] sm:$0xff]
    %v419 = vld [vmem:[%s3 + $0x38] sm:$0xff]
    %v420 = vld [vmem:[%s3 + $0x40] sm:$0xff]
    %v421 = vld [vmem:[%s3 + $0x48] sm:$0xff]
    %v422 = vld [vmem:[%s3 + $0x50] sm:$0xff]
    %v423 = vld [vmem:[%s3 + $0x58] sm:$0xff]
    %v424 = vld [vmem:[%s3 + $0x60] sm:$0xff]
    %v425 = vld [vmem:[%s3 + $0x68] sm:$0xff]
    %v426 = vld [vmem:[%s3 + $0x70] sm:$0xff]
    %v427 = vld [vmem:[%s3 + $0x78] sm:$0xff]
    %v428 = vld [vmem:[%s3 + $0x80] sm:$0xff]
    %v429 = vld [vmem:[%s3 + $0x88] sm:$0xff]
    %v430 = vld [vmem:[%s3 + $0x90] sm:$0xff]
    %v431 = vld [vmem:[%s3 + $0x98] sm:$0xff]
    %v432 = vld [vmem:[%s3 + $0xa0] sm:$0xff]
    %v433 = vld [vmem:[%s3 + $0xa8] sm:$0xff]
    %v434 = vld [vmem:[%s3 + $0xb0] sm:$0xff]
    %v435 = vld [vmem:[%s3 + $0xb8] sm:$0xff]
    %v436 = vld [vmem:[%s3 + $0xc0] sm:$0xff]
    %v437 = vld [vmem:[%s3 + $0xc8] sm:$0xff]
    %v438 = vld [vmem:[%s3 + $0xd0] sm:$0xff]
    %v439 = vld [vmem:[%s3 + $0xd8] sm:$0xff]
    %v440 = vld [vmem:[%s3 + $0xe0] sm:$0xff]
    %v441 = vld [vmem:[%s3 + $0xe8] sm:$0xff]
    %v442 = vld [vmem:[%s3 + $0xf0] sm:$0xff]
    %v443 = vld [vmem:[%s3 + $0xf8] sm:$0xff]
    %v444 = vld [vmem:[%s3 + $0x100] sm:$0xff]
    %v445 = vld [vmem:[%s3 + $0x108] sm:$0xff]
    %v446 = vld [vmem:[%s3 + $0x110] sm:$0xff]
    %v447 = vld [vmem:[%s3 + $0x118] sm:$0xff]
    %v448 = vld [vmem:[%s3 + $0x120] sm:$0xff]
    %v449 = vld [vmem:[%s3 + $0x128] sm:$0xff]
    %v450 = vld [vmem:[%s3 + $0x130] sm:$0xff]
    %v451 = vld [vmem:[%s3 + $0x138] sm:$0xff]
    %v452 = vld [vmem:[%s3 + $0x140] sm:$0xff]
    %v453 = vld [vmem:[%s3 + $0x148] sm:$0xff]
    %v454 = vld [vmem:[%s3 + $0x150] sm:$0xff]
    %v455 = vld [vmem:[%s3 + $0x158] sm:$0xff]
    %v456 = vld [vmem:[%s3 + $0x160] sm:$0xff]
    %v457 = vld [vmem:[%s3 + $0x168] sm:$0xff]
    %v458 = vld [vmem:[%s3 + $0x170] sm:$0xff]
    %v459 = vld [vmem:[%s3 + $0x178] sm:$0xff]
    %v460 = vld [vmem:[%s3 + $0x180] sm:$0xff]
    %v461 = vld [vmem:[%s3 + $0x188] sm:$0xff]
    %v462 = vld [vmem:[%s3 + $0x190] sm:$0xff]
    %v463 = vld [vmem:[%s3 + $0x198] sm:$0xff]
    %v464 = vld [vmem:[%s3 + $0x1a0] sm:$0xff]
    %v465 = vld [vmem:[%s3 + $0x1a8] sm:$0xff]
    %v466 = vld [vmem:[%s3 + $0x1b0] sm:$0xff]
    %v467 = vld [vmem:[%s3 + $0x1b8] sm:$0xff]
    %v468 = vld [vmem:[%s3 + $0x1c0] sm:$0xff]
    %v469 = vld [vmem:[%s3 + $0x1c8] sm:$0xff]
    %v470 = vld [vmem:[%s3 + $0x1d0] sm:$0xff]
    %v471 = vld [vmem:[%s3 + $0x1d8] sm:$0xff]
    %v472 = vld [vmem:[%s3 + $0x1e0] sm:$0xff]
    %v473 = vld [vmem:[%s3 + $0x1e8] sm:$0xff]
    %v474 = vld [vmem:[%s3 + $0x1f0] sm:$0xff]
    %v475 = vld [vmem:[%s3 + $0x1f8] sm:$0xff]
    %v476 = vld [vmem:[%s3 + $0x200] sm:$0xff]
    %v477 = vld [vmem:[%s3 + $0x208] sm:$0xff]
    %v478 = vld [vmem:[%s3 + $0x210] sm:$0xff]
    %v479 = vld [vmem:[%s3 + $0x218] sm:$0xff]
    %v480 = vld [vmem:[%s3 + $0x220] sm:$0xff]
    %v481 = vld [vmem:[%s3 + $0x228] sm:$0xff]
    %v482 = vld [vmem:[%s3 + $0x230] sm:$0xff]
    %v483 = vld [vmem:[%s3 + $0x238] sm:$0xff]
    %v484 = vld [vmem:[%s3 + $0x240] sm:$0xff]
    %v485 = vld [vmem:[%s3 + $0x248] sm:$0xff]
    %v486 = vld [vmem:[%s3 + $0x250] sm:$0xff]
    %v487 = vld [vmem:[%s3 + $0x258] sm:$0xff]
    %v488 = vld [vmem:[%s3 + $0x260] sm:$0xff]
    %v489 = vld [vmem:[%s3 + $0x268] sm:$0xff]
    %v490 = vld [vmem:[%s3 + $0x270] sm:$0xff]
    %v491 = vld [vmem:[%s3 + $0x278] sm:$0xff]
    %v492 = vld [vmem:[%s3 + $0x280] sm:$0xff]
    %v493 = vld [vmem:[%s3 + $0x288] sm:$0xff]
    %v494 = vld [vmem:[%s3 + $0x290] sm:$0xff]
    %v495 = vld [vmem:[%s3 + $0x298] sm:$0xff]
    %v496 = vld [vmem:[%s3 + $0x2a0] sm:$0xff]
    %v497 = vld [vmem:[%s3 + $0x2a8] sm:$0xff]
    %v498 = vld [vmem:[%s3 + $0x2b0] sm:$0xff]
    %v499 = vld [vmem:[%s3 + $0x2b8] sm:$0xff]
    %v500 = vld [vmem:[%s3 + $0x2c0] sm:$0xff]
    %v501 = vld [vmem:[%s3 + $0x2c8] sm:$0xff]
    %v502 = vld [vmem:[%s3 + $0x2d0] sm:$0xff]
    %v503 = vld [vmem:[%s3 + $0x2d8] sm:$0xff]
    %v504 = vld [vmem:[%s3 + $0x2e0] sm:$0xff]
    %v505 = vld [vmem:[%s3 + $0x2e8] sm:$0xff]
    %v506 = vld [vmem:[%s3 + $0x2f0] sm:$0xff]
    %v507 = vld [vmem:[%s3 + $0x2f8] sm:$0xff]
    %v508 = vld [vmem:[%s3 + $0x300] sm:$0xff]
    %v509 = vld [vmem:[%s3 + $0x308] sm:$0xff]
    %v510 = vld [vmem:[%s3 + $0x310] sm:$0xff]
    %v511 = vld [vmem:[%s3 + $0x318] sm:$0xff]
    %v512 = vld [vmem:[%s3 + $0x320] sm:$0xff]
    %v513 = vld [vmem:[%s3 + $0x328] sm:$0xff]
    %v514 = vld [vmem:[%s3 + $0x330] sm:$0xff]
    %v515 = vld [vmem:[%s3 + $0x338] sm:$0xff]
    %v516 = vld [vmem:[%s3 + $0x340] sm:$0xff]
    %v517 = vld [vmem:[%s3 + $0x348] sm:$0xff]
    %v518 = vld [vmem:[%s3 + $0x350] sm:$0xff]
    %v519 = vld [vmem:[%s3 + $0x358] sm:$0xff]
    %v520 = vld [vmem:[%s3 + $0x360] sm:$0xff]
    %v521 = vld [vmem:[%s3 + $0x368] sm:$0xff]
    %v522 = vld [vmem:[%s3 + $0x370] sm:$0xff]
    %v523 = vld [vmem:[%s3 + $0x378] sm:$0xff]
    %v524 = vld [vmem:[%s3 + $0x380] sm:$0xff]
    %v525 = vld [vmem:[%s3 + $0x388] sm:$0xff]
    %v526 = vld [vmem:[%s3 + $0x390] sm:$0xff]
    %v527 = vld [vmem:[%s3 + $0x398] sm:$0xff]
    %v528 = vld [vmem:[%s3 + $0x3a0] sm:$0xff]
    %v529 = vld [vmem:[%s3 + $0x3a8] sm:$0xff]
    %v530 = vld [vmem:[%s3 + $0x3b0] sm:$0xff]
    %v531 = vld [vmem:[%s3 + $0x3b8] sm:$0xff]
    %v532 = vld [vmem:[%s3 + $0x3c0] sm:$0xff]
    %v533 = vld [vmem:[%s3 + $0x3c8] sm:$0xff]
    %v534 = vld [vmem:[%s3 + $0x3d0] sm:$0xff]
    %v535 = vld [vmem:[%s3 + $0x3d8] sm:$0xff]
    %v536 = vld [vmem:[%s3 + $0x3e0] sm:$0xff]
    %v537 = vld [vmem:[%s3 + $0x3e8] sm:$0xff]
    %v538 = vld [vmem:[%s3 + $0x3f0] sm:$0xff]
    %v539 = vld [vmem:[%s3 + $0x3f8] sm:$0xff]
    %v540 = vld [vmem:[%s3 + $0x400] sm:$0xff]
    %v541 = vld [vmem:[%s3 + $0x408] sm:$0xff]
    %v542 = vld [vmem:[%s3 + $0x410] sm:$0xff]
    %v543 = vld [vmem:[%s3 + $0x418] sm:$0xff]
    %v544 = vld [vmem:[%s3 + $0x420] sm:$0xff]
    %v545 = vld [vmem:[%s3 + $0x428] sm:$0xff]
    %v546 = vld [vmem:[%s3 + $0x430] sm:$0xff]
    %v547 = vld [vmem:[%s3 + $0x438] sm:$0xff]
    %v548 = vld [vmem:[%s3 + $0x440] sm:$0xff]
    %v549 = vld [vmem:[%s3 + $0x448] sm:$0xff]
    %v550 = vld [vmem:[%s3 + $0x450] sm:$0xff]
    %v551 = vld [vmem:[%s3 + $0x458] sm:$0xff]
    %v552 = vld [vmem:[%s3 + $0x460] sm:$0xff]
    %v553 = vld [vmem:[%s3 + $0x468] sm:$0xff]
    %v554 = vld [vmem:[%s3 + $0x470] sm:$0xff]
    %v555 = vld [vmem:[%s3 + $0x478] sm:$0xff]
    %v556 = vld [vmem:[%s3 + $0x480] sm:$0xff]
    %v557 = vld [vmem:[%s3 + $0x488] sm:$0xff]
    %v558 = vld [vmem:[%s3 + $0x490] sm:$0xff]
    %v559 = vld [vmem:[%s3 + $0x498] sm:$0xff]
    %v560 = vld [vmem:[%s3 + $0x4a0] sm:$0xff]
    %v561 = vld [vmem:[%s3 + $0x4a8] sm:$0xff]
    %v562 = vld [vmem:[%s3 + $0x4b0] sm:$0xff]
    %v563 = vld [vmem:[%s3 + $0x4b8] sm:$0xff]
    %v564 = vld [vmem:[%s3 + $0x4c0] sm:$0xff]
    %v565 = vld [vmem:[%s3 + $0x4c8] sm:$0xff]
    %v566 = vld [vmem:[%s3 + $0x4d0] sm:$0xff]
    %v567 = vld [vmem:[%s3 + $0x4d8] sm:$0xff]
    %v568 = vld [vmem:[%s3 + $0x4e0] sm:$0xff]
    %v569 = vld [vmem:[%s3 + $0x4e8] sm:$0xff]
    %v570 = vld [vmem:[%s3 + $0x4f0] sm:$0xff]
    %v571 = vld [vmem:[%s3 + $0x4f8] sm:$0xff]
    %v572 = vld [vmem:[%s3 + $0x500] sm:$0xff]
    %v573 = vld [vmem:[%s3 + $0x508] sm:$0xff]
    %v574 = vld [vmem:[%s3 + $0x510] sm:$0xff]
    %v575 = vld [vmem:[%s3 + $0x518] sm:$0xff]
    %v576 = vld [vmem:[%s3 + $0x520] sm:$0xff]
    %v577 = vld [vmem:[%s3 + $0x528] sm:$0xff]
    %v578 = vld [vmem:[%s3 + $0x530] sm:$0xff]
    %v579 = vld [vmem:[%s3 + $0x538] sm:$0xff]
    %v580 = vld [vmem:[%s3 + $0x540] sm:$0xff]
    %v581 = vld [vmem:[%s3 + $0x548] sm:$0xff]
    %v582 = vld [vmem:[%s3 + $0x550] sm:$0xff]
    %v583 = vld [vmem:[%s3 + $0x558] sm:$0xff]
    %v584 = vld [vmem:[%s3 + $0x560] sm:$0xff]
    %v585 = vld [vmem:[%s3 + $0x568] sm:$0xff]
    %v586 = vld [vmem:[%s3 + $0x570] sm:$0xff]
    %v587 = vld [vmem:[%s3 + $0x578] sm:$0xff]
    %v588 = vld [vmem:[%s3 + $0x580] sm:$0xff]
    %v589 = vld [vmem:[%s3 + $0x588] sm:$0xff]
    %v590 = vld [vmem:[%s3 + $0x590] sm:$0xff]
    %v591 = vld [vmem:[%s3 + $0x598] sm:$0xff]
    %v592 = vld [vmem:[%s3 + $0x5a0] sm:$0xff]
    %v593 = vld [vmem:[%s3 + $0x5a8] sm:$0xff]
    %v594 = vld [vmem:[%s3 + $0x5b0] sm:$0xff]
    %v595 = vld [vmem:[%s3 + $0x5b8] sm:$0xff]
    %v596 = vld [vmem:[%s3 + $0x5c0] sm:$0xff]
    %v597 = vld [vmem:[%s3 + $0x5c8] sm:$0xff]
    %v598 = vld [vmem:[%s3 + $0x5d0] sm:$0xff]
    %v599 = vld [vmem:[%s3 + $0x5d8] sm:$0xff]
    %v600 = vld [vmem:[%s3 + $0x5e0] sm:$0xff]
    %v601 = vld [vmem:[%s3 + $0x5e8] sm:$0xff]
    %v602 = vld [vmem:[%s3 + $0x5f0] sm:$0xff]
    %v603 = vld [vmem:[%s3 + $0x5f8] sm:$0xff]
    %v604 = vld [vmem:[%s3 + $0x600] sm:$0xff]
    %v605 = vld [vmem:[%s3 + $0x608] sm:$0xff]
    %v606 = vld [vmem:[%s3 + $0x610] sm:$0xff]
    %v607 = vld [vmem:[%s3 + $0x618] sm:$0xff]
    %v608 = vld [vmem:[%s3 + $0x620] sm:$0xff]
    %v609 = vld [vmem:[%s3 + $0x628] sm:$0xff]
    %v610 = vld [vmem:[%s3 + $0x630] sm:$0xff]
    %v611 = vld [vmem:[%s3 + $0x638] sm:$0xff]
    %v612 = vld [vmem:[%s3 + $0x640] sm:$0xff]
    %v613 = vld [vmem:[%s3 + $0x648] sm:$0xff]
    %v614 = vld [vmem:[%s3 + $0x650] sm:$0xff]
    %v615 = vld [vmem:[%s3 + $0x658] sm:$0xff]
    %v616 = vld [vmem:[%s3 + $0x660] sm:$0xff]
    %v617 = vld [vmem:[%s3 + $0x668] sm:$0xff]
    %v618 = vld [vmem:[%s3 + $0x670] sm:$0xff]
    %v619 = vld [vmem:[%s3 + $0x678] sm:$0xff]
    %v620 = vld [vmem:[%s3 + $0x680] sm:$0xff]
    %v621 = vld [vmem:[%s3 + $0x688] sm:$0xff]
    %v622 = vld [vmem:[%s3 + $0x690] sm:$0xff]
    %v623 = vld [vmem:[%s3 + $0x698] sm:$0xff]
    %v624 = vld [vmem:[%s3 + $0x6a0] sm:$0xff]
    %v625 = vld [vmem:[%s3 + $0x6a8] sm:$0xff]
    %v626 = vld [vmem:[%s3 + $0x6b0] sm:$0xff]
    %v627 = vld [vmem:[%s3 + $0x6b8] sm:$0xff]
    %v628 = vld [vmem:[%s3 + $0x6c0] sm:$0xff]
    %v629 = vld [vmem:[%s3 + $0x6c8] sm:$0xff]
    %v630 = vld [vmem:[%s3 + $0x6d0] sm:$0xff]
    %v631 = vld [vmem:[%s3 + $0x6d8] sm:$0xff]
    %v632 = vld [vmem:[%s3 + $0x6e0] sm:$0xff]
    %v633 = vld [vmem:[%s3 + $0x6e8] sm:$0xff]
    %v634 = vld [vmem:[%s3 + $0x6f0] sm:$0xff]
    %v635 = vld [vmem:[%s3 + $0x6f8] sm:$0xff]
    %v636 = vld [vmem:[%s3 + $0x700] sm:$0xff]
    %v637 = vld [vmem:[%s3 + $0x708] sm:$0xff]
    %v638 = vld [vmem:[%s3 + $0x710] sm:$0xff]
    %v639 = vld [vmem:[%s3 + $0x718] sm:$0xff]
    %v640 = vld [vmem:[%s3 + $0x720] sm:$0xff]
    %v641 = vld [vmem:[%s3 + $0x728] sm:$0xff]
    %v642 = vld [vmem:[%s3 + $0x730] sm:$0xff]
    %v643 = vld [vmem:[%s3 + $0x738] sm:$0xff]
    %v644 = vld [vmem:[%s3 + $0x740] sm:$0xff]
    %v645 = vld [vmem:[%s3 + $0x748] sm:$0xff]
    %v646 = vld [vmem:[%s3 + $0x750] sm:$0xff]
    %v647 = vld [vmem:[%s3 + $0x758] sm:$0xff]
    %v648 = vld [vmem:[%s3 + $0x760] sm:$0xff]
    %v649 = vld [vmem:[%s3 + $0x768] sm:$0xff]
    %v650 = vld [vmem:[%s3 + $0x770] sm:$0xff]
    %v651 = vld [vmem:[%s3 + $0x778] sm:$0xff]
    %v652 = vld [vmem:[%s3 + $0x780] sm:$0xff]
    %v653 = vld [vmem:[%s3 + $0x788] sm:$0xff]
    %v654 = vld [vmem:[%s3 + $0x790] sm:$0xff]
    %v655 = vld [vmem:[%s3 + $0x798] sm:$0xff]
    %v656 = vld [vmem:[%s3 + $0x7a0] sm:$0xff]
    %v657 = vld [vmem:[%s3 + $0x7a8] sm:$0xff]
    %v658 = vld [vmem:[%s3 + $0x7b0] sm:$0xff]
    %v659 = vld [vmem:[%s3 + $0x7b8] sm:$0xff]
    %v660 = vld [vmem:[%s3 + $0x7c0] sm:$0xff]
    %v661 = vld [vmem:[%s3 + $0x7c8] sm:$0xff]
    %v662 = vld [vmem:[%s3 + $0x7d0] sm:$0xff]
    %v663 = vld [vmem:[%s3 + $0x7d8] sm:$0xff]
    %v664 = vld [vmem:[%s3 + $0x7e0] sm:$0xff]
    %v665 = vld [vmem:[%s3 + $0x7e8] sm:$0xff]
    %v666 = vld [vmem:[%s3 + $0x7f0] sm:$0xff]
    %v667 = vld [vmem:[%s3 + $0x7f8] sm:$0xff]
    %v668 = vld [vmem:[%s3 + $0x800] sm:$0xff]
    %v669 = vld [vmem:[%s3 + $0x808] sm:$0xff]
    %v670 = vld [vmem:[%s3 + $0x810] sm:$0xff]
    %v671 = vld [vmem:[%s3 + $0x818] sm:$0xff]
    %v672 = vld [vmem:[%s3 + $0x820] sm:$0xff]
    %v673 = vld [vmem:[%s3 + $0x828] sm:$0xff]
    %v674 = vld [vmem:[%s3 + $0x830] sm:$0xff]
    %v675 = vld [vmem:[%s3 + $0x838] sm:$0xff]
    %v676 = vld [vmem:[%s3 + $0x840] sm:$0xff]
    %v677 = vld [vmem:[%s3 + $0x848] sm:$0xff]
    %v678 = vld [vmem:[%s3 + $0x850] sm:$0xff]
    %v679 = vld [vmem:[%s3 + $0x858] sm:$0xff]
    %v680 = vld [vmem:[%s3 + $0x860] sm:$0xff]
    %v681 = vld [vmem:[%s3 + $0x868] sm:$0xff]
    %v682 = vld [vmem:[%s3 + $0x870] sm:$0xff]
    %v683 = vld [vmem:[%s3 + $0x878] sm:$0xff]
    %v684 = vld [vmem:[%s3 + $0x880] sm:$0xff]
    %v685 = vld [vmem:[%s3 + $0x888] sm:$0xff]
    %v686 = vld [vmem:[%s3 + $0x890] sm:$0xff]
    %v687 = vld [vmem:[%s3 + $0x898] sm:$0xff]
    %v688 = vld [vmem:[%s3 + $0x8a0] sm:$0xff]
    %v689 = vld [vmem:[%s3 + $0x8a8] sm:$0xff]
    %v690 = vld [vmem:[%s3 + $0x8b0] sm:$0xff]
    %v691 = vld [vmem:[%s3 + $0x8b8] sm:$0xff]
    %v692 = vld [vmem:[%s3 + $0x8c0] sm:$0xff]
    %v693 = vld [vmem:[%s3 + $0x8c8] sm:$0xff]
    %v694 = vld [vmem:[%s3 + $0x8d0] sm:$0xff]
    %v695 = vld [vmem:[%s3 + $0x8d8] sm:$0xff]
    %v696 = vld [vmem:[%s3 + $0x8e0] sm:$0xff]
    %v697 = vld [vmem:[%s3 + $0x8e8] sm:$0xff]
    %v698 = vld [vmem:[%s3 + $0x8f0] sm:$0xff]
    %v699 = vld [vmem:[%s3 + $0x8f8] sm:$0xff]
    %v700 = vld [vmem:[%s3 + $0x900] sm:$0xff]
    %v701 = vld [vmem:[%s3 + $0x908] sm:$0xff]
    %v702 = vld [vmem:[%s3 + $0x910] sm:$0xff]
    %v703 = vld [vmem:[%s3 + $0x918] sm:$0xff]
    %v704 = vld [vmem:[%s3 + $0x920] sm:$0xff]
    %v705 = vld [vmem:[%s3 + $0x928] sm:$0xff]
    %v706 = vld [vmem:[%s3 + $0x930] sm:$0xff]
    %v707 = vld [vmem:[%s3 + $0x938] sm:$0xff]
    %v708 = vld [vmem:[%s3 + $0x940] sm:$0xff]
    %v709 = vld [vmem:[%s3 + $0x948] sm:$0xff]
    %v710 = vld [vmem:[%s3 + $0x950] sm:$0xff]
    %v711 = vld [vmem:[%s3 + $0x958] sm:$0xff]
    %v712 = vld [vmem:[%s3 + $0x960] sm:$0xff]
    %v713 = vld [vmem:[%s3 + $0x968] sm:$0xff]
    %v714 = vld [vmem:[%s3 + $0x970] sm:$0xff]
    %v715 = vld [vmem:[%s3 + $0x978] sm:$0xff]
    %v716 = vld [vmem:[%s3 + $0x980] sm:$0xff]
    %v717 = vld [vmem:[%s3 + $0x988] sm:$0xff]
    %v718 = vld [vmem:[%s3 + $0x990] sm:$0xff]
    %v719 = vld [vmem:[%s3 + $0x998] sm:$0xff]
    %v720 = vld [vmem:[%s3 + $0x9a0] sm:$0xff]
    %v721 = vld [vmem:[%s3 + $0x9a8] sm:$0xff]
    %v722 = vld [vmem:[%s3 + $0x9b0] sm:$0xff]
    %v723 = vld [vmem:[%s3 + $0x9b8] sm:$0xff]
    %v724 = vld [vmem:[%s3 + $0x9c0] sm:$0xff]
    %v725 = vld [vmem:[%s3 + $0x9c8] sm:$0xff]
    %v726 = vld [vmem:[%s3 + $0x9d0] sm:$0xff]
    %v727 = vld [vmem:[%s3 + $0x9d8] sm:$0xff]
    %v728 = vld [vmem:[%s3 + $0x9e0] sm:$0xff]
    %v729 = vld [vmem:[%s3 + $0x9e8] sm:$0xff]
    %v730 = vld [vmem:[%s3 + $0x9f0] sm:$0xff]
    %v731 = vld [vmem:[%s3 + $0x9f8] sm:$0xff]
    %v732 = vld [vmem:[%s3 + $0xa00] sm:$0xff]
    %v733 = vld [vmem:[%s3 + $0xa08] sm:$0xff]
    %v734 = vld [vmem:[%s3 + $0xa10] sm:$0xff]
    %v735 = vld [vmem:[%s3 + $0xa18] sm:$0xff]
    %v736 = vld [vmem:[%s4] sm:$0x3]
    %v738 = vperm.slane %v736, 0
    %v739 = vperm.slane %v736, 1
    %vm742 = vcmask 130048
    %v744 = vsel %vm742, %v411, 0
    %746 = vmatpush.msra.mxu0 %v442
    %747 = vmatpush.msra.mxu0 %v440
    %748 = vmatpush.msra.mxu0 %v438
    %749 = vmatpush.msra.mxu0 %v436
    %750 = vmatpush.msra.mxu0 %v434
    %751 = vmatpush.msra.mxu0 %v432
    %752 = vmatpush.msra.mxu0 %v430
    %753 = vmatpush.msra.mxu0 %v428
    %754 = vmatpush.msra.mxu0 %v426
    %755 = vmatpush.msra.mxu0 %v424
    %756 = vmatpush.msra.mxu0 %v422
    %757 = vmatpush.msra.mxu0 %v420
    %758 = vmatpush.msra.mxu0 %v418
    %759 = vmatpush.msra.mxu0 %v416
    %760 = vmatpush.msra.mxu0 %v414
    %761 = vmatpush.msra.mxu0 %v412
    %762 = vmatmul.f32.gmra.mxu0 %v401
    %v763 = vpop.f32.mrf.mxu0
    %v764 = vadd.f32 %v738, %v763
    %765 = vdwg.mxu0
    %766 = vmatpush.msra.mxu0 %v474
    %767 = vmatpush.msra.mxu0 %v472
    %768 = vmatpush.msra.mxu0 %v470
    %769 = vmatpush.msra.mxu0 %v468
    %770 = vmatpush.msra.mxu0 %v466
    %771 = vmatpush.msra.mxu0 %v464
    %772 = vmatpush.msra.mxu0 %v462
    %773 = vmatpush.msra.mxu0 %v460
    %774 = vmatpush.msra.mxu0 %v458
    %775 = vmatpush.msra.mxu0 %v456
    %776 = vmatpush.msra.mxu0 %v454
    %777 = vmatpush.msra.mxu0 %v452
    %778 = vmatpush.msra.mxu0 %v450
    %779 = vmatpush.msra.mxu0 %v448
    %780 = vmatpush.msra.mxu0 %v446
    %781 = vmatpush.msra.mxu0 %v444
    %782 = vmatmul.f32.gmra.mxu0 %v402
    %v783 = vpop.f32.mrf.mxu0
    %v784 = vadd.f32 %v764, %v783
    %785 = vdwg.mxu0
    %786 = vmatpush.msra.mxu0 %v506
    %787 = vmatpush.msra.mxu0 %v504
    %788 = vmatpush.msra.mxu0 %v502
    %789 = vmatpush.msra.mxu0 %v500
    %790 = vmatpush.msra.mxu0 %v498
    %791 = vmatpush.msra.mxu0 %v496
    %792 = vmatpush.msra.mxu0 %v494
    %793 = vmatpush.msra.mxu0 %v492
    %794 = vmatpush.msra.mxu0 %v490
    %795 = vmatpush.msra.mxu0 %v488
    %796 = vmatpush.msra.mxu0 %v486
    %797 = vmatpush.msra.mxu0 %v484
    %798 = vmatpush.msra.mxu0 %v482
    %799 = vmatpush.msra.mxu0 %v480
    %800 = vmatpush.msra.mxu0 %v478
    %801 = vmatpush.msra.mxu0 %v476
    %802 = vmatmul.f32.gmra.mxu0 %v403
    %v803 = vpop.f32.mrf.mxu0
    %v804 = vadd.f32 %v784, %v803
    %805 = vdwg.mxu0
    %806 = vmatpush.msra.mxu0 %v538
    %807 = vmatpush.msra.mxu0 %v536
    %808 = vmatpush.msra.mxu0 %v534
    %809 = vmatpush.msra.mxu0 %v532
    %810 = vmatpush.msra.mxu0 %v530
    %811 = vmatpush.msra.mxu0 %v528
    %812 = vmatpush.msra.mxu0 %v526
    %813 = vmatpush.msra.mxu0 %v524
    %814 = vmatpush.msra.mxu0 %v522
    %815 = vmatpush.msra.mxu0 %v520
    %816 = vmatpush.msra.mxu0 %v518
    %817 = vmatpush.msra.mxu0 %v516
    %818 = vmatpush.msra.mxu0 %v514
    %819 = vmatpush.msra.mxu0 %v512
    %820 = vmatpush.msra.mxu0 %v510
    %821 = vmatpush.msra.mxu0 %v508
    %822 = vmatmul.f32.gmra.mxu0 %v404
    %v823 = vpop.f32.mrf.mxu0
    %v824 = vadd.f32 %v804, %v823
    %825 = vdwg.mxu0
    %826 = vmatpush.msra.mxu0 %v570
    %827 = vmatpush.msra.mxu0 %v568
    %828 = vmatpush.msra.mxu0 %v566
    %829 = vmatpush.msra.mxu0 %v564
    %830 = vmatpush.msra.mxu0 %v562
    %831 = vmatpush.msra.mxu0 %v560
    %832 = vmatpush.msra.mxu0 %v558
    %833 = vmatpush.msra.mxu0 %v556
    %834 = vmatpush.msra.mxu0 %v554
    %835 = vmatpush.msra.mxu0 %v552
    %836 = vmatpush.msra.mxu0 %v550
    %837 = vmatpush.msra.mxu0 %v548
    %838 = vmatpush.msra.mxu0 %v546
    %839 = vmatpush.msra.mxu0 %v544
    %840 = vmatpush.msra.mxu0 %v542
    %841 = vmatpush.msra.mxu0 %v540
    %842 = vmatmul.f32.gmra.mxu0 %v405
    %v843 = vpop.f32.mrf.mxu0
    %v844 = vadd.f32 %v824, %v843
    %845 = vdwg.mxu0
    %846 = vmatpush.msra.mxu0 %v602
    %847 = vmatpush.msra.mxu0 %v600
    %848 = vmatpush.msra.mxu0 %v598
    %849 = vmatpush.msra.mxu0 %v596
    %850 = vmatpush.msra.mxu0 %v594
    %851 = vmatpush.msra.mxu0 %v592
    %852 = vmatpush.msra.mxu0 %v590
    %853 = vmatpush.msra.mxu0 %v588
    %854 = vmatpush.msra.mxu0 %v586
    %855 = vmatpush.msra.mxu0 %v584
    %856 = vmatpush.msra.mxu0 %v582
    %857 = vmatpush.msra.mxu0 %v580
    %858 = vmatpush.msra.mxu0 %v578
    %859 = vmatpush.msra.mxu0 %v576
    %860 = vmatpush.msra.mxu0 %v574
    %861 = vmatpush.msra.mxu0 %v572
    %862 = vmatmul.f32.gmra.mxu0 %v406
    %v863 = vpop.f32.mrf.mxu0
    %v864 = vadd.f32 %v844, %v863
    %865 = vdwg.mxu0
    %866 = vmatpush.msra.mxu0 %v634
    %867 = vmatpush.msra.mxu0 %v632
    %868 = vmatpush.msra.mxu0 %v630
    %869 = vmatpush.msra.mxu0 %v628
    %870 = vmatpush.msra.mxu0 %v626
    %871 = vmatpush.msra.mxu0 %v624
    %872 = vmatpush.msra.mxu0 %v622
    %873 = vmatpush.msra.mxu0 %v620
    %874 = vmatpush.msra.mxu0 %v618
    %875 = vmatpush.msra.mxu0 %v616
    %876 = vmatpush.msra.mxu0 %v614
    %877 = vmatpush.msra.mxu0 %v612
    %878 = vmatpush.msra.mxu0 %v610
    %879 = vmatpush.msra.mxu0 %v608
    %880 = vmatpush.msra.mxu0 %v606
    %881 = vmatpush.msra.mxu0 %v604
    %882 = vmatmul.f32.gmra.mxu0 %v407
    %v883 = vpop.f32.mrf.mxu0
    %v884 = vadd.f32 %v864, %v883
    %885 = vdwg.mxu0
    %886 = vmatpush.msra.mxu0 %v666
    %887 = vmatpush.msra.mxu0 %v664
    %888 = vmatpush.msra.mxu0 %v662
    %889 = vmatpush.msra.mxu0 %v660
    %890 = vmatpush.msra.mxu0 %v658
    %891 = vmatpush.msra.mxu0 %v656
    %892 = vmatpush.msra.mxu0 %v654
    %893 = vmatpush.msra.mxu0 %v652
    %894 = vmatpush.msra.mxu0 %v650
    %895 = vmatpush.msra.mxu0 %v648
    %896 = vmatpush.msra.mxu0 %v646
    %897 = vmatpush.msra.mxu0 %v644
    %898 = vmatpush.msra.mxu0 %v642
    %899 = vmatpush.msra.mxu0 %v640
    %900 = vmatpush.msra.mxu0 %v638
    %901 = vmatpush.msra.mxu0 %v636
    %902 = vmatmul.f32.gmra.mxu0 %v408
    %v903 = vpop.f32.mrf.mxu0
    %v904 = vadd.f32 %v884, %v903
    %905 = vdwg.mxu0
    %906 = vmatpush.msra.mxu0 %v698
    %907 = vmatpush.msra.mxu0 %v696
    %908 = vmatpush.msra.mxu0 %v694
    %909 = vmatpush.msra.mxu0 %v692
    %910 = vmatpush.msra.mxu0 %v690
    %911 = vmatpush.msra.mxu0 %v688
    %912 = vmatpush.msra.mxu0 %v686
    %913 = vmatpush.msra.mxu0 %v684
    %914 = vmatpush.msra.mxu0 %v682
    %915 = vmatpush.msra.mxu0 %v680
    %916 = vmatpush.msra.mxu0 %v678
    %917 = vmatpush.msra.mxu0 %v676
    %918 = vmatpush.msra.mxu0 %v674
    %919 = vmatpush.msra.mxu0 %v672
    %920 = vmatpush.msra.mxu0 %v670
    %921 = vmatpush.msra.mxu0 %v668
    %922 = vmatmul.f32.gmra.mxu0 %v409
    %v923 = vpop.f32.mrf.mxu0
    %v924 = vadd.f32 %v904, %v923
    %925 = vdwg.mxu0
    %926 = vmatpush.msra.mxu0 %v730
    %927 = vmatpush.msra.mxu0 %v728
    %928 = vmatpush.msra.mxu0 %v726
    %929 = vmatpush.msra.mxu0 %v724
    %930 = vmatpush.msra.mxu0 %v722
    %931 = vmatpush.msra.mxu0 %v720
    %932 = vmatpush.msra.mxu0 %v718
    %933 = vmatpush.msra.mxu0 %v716
    %934 = vmatpush.msra.mxu0 %v714
    %935 = vmatpush.msra.mxu0 %v712
    %936 = vmatpush.msra.mxu0 %v710
    %937 = vmatpush.msra.mxu0 %v708
    %938 = vmatpush.msra.mxu0 %v706
    %939 = vmatpush.msra.mxu0 %v704
    %940 = vmatpush.msra.mxu0 %v702
    %941 = vmatpush.msra.mxu0 %v700
    %942 = vmatmul.f32.gmra.mxu0 %v410
    %v943 = vpop.f32.mrf.mxu0
    %v944 = vadd.f32 %v924, %v943
    %945 = vdwg.mxu0
    %946 = vmatpush.msra.mxu0 0.0
    %947 = vmatpush.msra.mxu0 0.0
    %948 = vmatpush.msra.mxu0 0.0
    %949 = vmatpush.msra.mxu0 0.0
    %950 = vmatpush.msra.mxu0 0.0
    %951 = vmatpush.msra.mxu0 0.0
    %952 = vmatpush.msra.mxu0 0.0
    %953 = vmatpush.msra.mxu0 0.0
    %954 = vmatpush.msra.mxu0 0.0
    %955 = vmatpush.msra.mxu0 0.0
    %956 = vmatpush.msra.mxu0 0.0
    %957 = vmatpush.msra.mxu0 0.0
    %958 = vmatpush.msra.mxu0 0.0
    %959 = vmatpush.msra.mxu0 0.0
    %960 = vmatpush.msra.mxu0 %v734
    %961 = vmatpush.msra.mxu0 %v732
    %962 = vmatmul.f32.gmra.mxu0 %v744
    %v963 = vpop.f32.mrf.mxu0
    %v964 = vadd.f32 %v944, %v963
    %965 = vdwg.mxu0
    %966 = vmatpush.msra.mxu0 %v443
    %967 = vmatpush.msra.mxu0 %v441
    %968 = vmatpush.msra.mxu0 %v439
    %969 = vmatpush.msra.mxu0 %v437
    %970 = vmatpush.msra.mxu0 %v435
    %971 = vmatpush.msra.mxu0 %v433
    %972 = vmatpush.msra.mxu0 %v431
    %973 = vmatpush.msra.mxu0 %v429
    %974 = vmatpush.msra.mxu0 %v427
    %975 = vmatpush.msra.mxu0 %v425
    %976 = vmatpush.msra.mxu0 %v423
    %977 = vmatpush.msra.mxu0 %v421
    %978 = vmatpush.msra.mxu0 %v419
    %979 = vmatpush.msra.mxu0 %v417
    %980 = vmatpush.msra.mxu0 %v415
    %981 = vmatpush.msra.mxu0 %v413
    %982 = vmatmul.f32.gmra.mxu0 %v401
    %v983 = vpop.f32.mrf.mxu0
    %v984 = vadd.f32 %v739, %v983
    %985 = vdwg.mxu0
    %986 = vmatpush.msra.mxu0 %v475
    %987 = vmatpush.msra.mxu0 %v473
    %988 = vmatpush.msra.mxu0 %v471
    %989 = vmatpush.msra.mxu0 %v469
    %990 = vmatpush.msra.mxu0 %v467
    %991 = vmatpush.msra.mxu0 %v465
    %992 = vmatpush.msra.mxu0 %v463
    %993 = vmatpush.msra.mxu0 %v461
    %994 = vmatpush.msra.mxu0 %v459
    %995 = vmatpush.msra.mxu0 %v457
    %996 = vmatpush.msra.mxu0 %v455
    %997 = vmatpush.msra.mxu0 %v453
    %998 = vmatpush.msra.mxu0 %v451
    %999 = vmatpush.msra.mxu0 %v449
    %1000 = vmatpush.msra.mxu0 %v447
    %1001 = vmatpush.msra.mxu0 %v445
    %1002 = vmatmul.f32.gmra.mxu0 %v402
    %v1003 = vpop.f32.mrf.mxu0
    %v1004 = vadd.f32 %v984, %v1003
    %1005 = vdwg.mxu0
    %1006 = vmatpush.msra.mxu0 %v507
    %1007 = vmatpush.msra.mxu0 %v505
    %1008 = vmatpush.msra.mxu0 %v503
    %1009 = vmatpush.msra.mxu0 %v501
    %1010 = vmatpush.msra.mxu0 %v499
    %1011 = vmatpush.msra.mxu0 %v497
    %1012 = vmatpush.msra.mxu0 %v495
    %1013 = vmatpush.msra.mxu0 %v493
    %1014 = vmatpush.msra.mxu0 %v491
    %1015 = vmatpush.msra.mxu0 %v489
    %1016 = vmatpush.msra.mxu0 %v487
    %1017 = vmatpush.msra.mxu0 %v485
    %1018 = vmatpush.msra.mxu0 %v483
    %1019 = vmatpush.msra.mxu0 %v481
    %1020 = vmatpush.msra.mxu0 %v479
    %1021 = vmatpush.msra.mxu0 %v477
    %1022 = vmatmul.f32.gmra.mxu0 %v403
    %v1023 = vpop.f32.mrf.mxu0
    %v1024 = vadd.f32 %v1004, %v1023
    %1025 = vdwg.mxu0
    %1026 = vmatpush.msra.mxu0 %v539
    %1027 = vmatpush.msra.mxu0 %v537
    %1028 = vmatpush.msra.mxu0 %v535
    %1029 = vmatpush.msra.mxu0 %v533
    %1030 = vmatpush.msra.mxu0 %v531
    %1031 = vmatpush.msra.mxu0 %v529
    %1032 = vmatpush.msra.mxu0 %v527
    %1033 = vmatpush.msra.mxu0 %v525
    %1034 = vmatpush.msra.mxu0 %v523
    %1035 = vmatpush.msra.mxu0 %v521
    %1036 = vmatpush.msra.mxu0 %v519
    %1037 = vmatpush.msra.mxu0 %v517
    %1038 = vmatpush.msra.mxu0 %v515
    %1039 = vmatpush.msra.mxu0 %v513
    %1040 = vmatpush.msra.mxu0 %v511
    %1041 = vmatpush.msra.mxu0 %v509
    %1042 = vmatmul.f32.gmra.mxu0 %v404
    %v1043 = vpop.f32.mrf.mxu0
    %v1044 = vadd.f32 %v1024, %v1043
    %1045 = vdwg.mxu0
    %1046 = vmatpush.msra.mxu0 %v571
    %1047 = vmatpush.msra.mxu0 %v569
    %1048 = vmatpush.msra.mxu0 %v567
    %1049 = vmatpush.msra.mxu0 %v565
    %1050 = vmatpush.msra.mxu0 %v563
    %1051 = vmatpush.msra.mxu0 %v561
    %1052 = vmatpush.msra.mxu0 %v559
    %1053 = vmatpush.msra.mxu0 %v557
    %1054 = vmatpush.msra.mxu0 %v555
    %1055 = vmatpush.msra.mxu0 %v553
    %1056 = vmatpush.msra.mxu0 %v551
    %1057 = vmatpush.msra.mxu0 %v549
    %1058 = vmatpush.msra.mxu0 %v547
    %1059 = vmatpush.msra.mxu0 %v545
    %1060 = vmatpush.msra.mxu0 %v543
    %1061 = vmatpush.msra.mxu0 %v541
    %1062 = vmatmul.f32.gmra.mxu0 %v405
    %v1063 = vpop.f32.mrf.mxu0
    %v1064 = vadd.f32 %v1044, %v1063
    %1065 = vdwg.mxu0
    %1066 = vmatpush.msra.mxu0 %v603
    %1067 = vmatpush.msra.mxu0 %v601
    %1068 = vmatpush.msra.mxu0 %v599
    %1069 = vmatpush.msra.mxu0 %v597
    %1070 = vmatpush.msra.mxu0 %v595
    %1071 = vmatpush.msra.mxu0 %v593
    %1072 = vmatpush.msra.mxu0 %v591
    %1073 = vmatpush.msra.mxu0 %v589
    %1074 = vmatpush.msra.mxu0 %v587
    %1075 = vmatpush.msra.mxu0 %v585
    %1076 = vmatpush.msra.mxu0 %v583
    %1077 = vmatpush.msra.mxu0 %v581
    %1078 = vmatpush.msra.mxu0 %v579
    %1079 = vmatpush.msra.mxu0 %v577
    %1080 = vmatpush.msra.mxu0 %v575
    %1081 = vmatpush.msra.mxu0 %v573
    %1082 = vmatmul.f32.gmra.mxu0 %v406
    %v1083 = vpop.f32.mrf.mxu0
    %v1084 = vadd.f32 %v1064, %v1083
    %1085 = vdwg.mxu0
    %1086 = vmatpush.msra.mxu0 %v635
    %1087 = vmatpush.msra.mxu0 %v633
    %1088 = vmatpush.msra.mxu0 %v631
    %1089 = vmatpush.msra.mxu0 %v629
    %1090 = vmatpush.msra.mxu0 %v627
    %1091 = vmatpush.msra.mxu0 %v625
    %1092 = vmatpush.msra.mxu0 %v623
    %1093 = vmatpush.msra.mxu0 %v621
    %1094 = vmatpush.msra.mxu0 %v619
    %1095 = vmatpush.msra.mxu0 %v617
    %1096 = vmatpush.msra.mxu0 %v615
    %1097 = vmatpush.msra.mxu0 %v613
    %1098 = vmatpush.msra.mxu0 %v611
    %1099 = vmatpush.msra.mxu0 %v609
    %1100 = vmatpush.msra.mxu0 %v607
    %1101 = vmatpush.msra.mxu0 %v605
    %1102 = vmatmul.f32.gmra.mxu0 %v407
    %v1103 = vpop.f32.mrf.mxu0
    %v1104 = vadd.f32 %v1084, %v1103
    %1105 = vdwg.mxu0
    %1106 = vmatpush.msra.mxu0 %v667
    %1107 = vmatpush.msra.mxu0 %v665
    %1108 = vmatpush.msra.mxu0 %v663
    %1109 = vmatpush.msra.mxu0 %v661
    %1110 = vmatpush.msra.mxu0 %v659
    %1111 = vmatpush.msra.mxu0 %v657
    %1112 = vmatpush.msra.mxu0 %v655
    %1113 = vmatpush.msra.mxu0 %v653
    %1114 = vmatpush.msra.mxu0 %v651
    %1115 = vmatpush.msra.mxu0 %v649
    %1116 = vmatpush.msra.mxu0 %v647
    %1117 = vmatpush.msra.mxu0 %v645
    %1118 = vmatpush.msra.mxu0 %v643
    %1119 = vmatpush.msra.mxu0 %v641
    %1120 = vmatpush.msra.mxu0 %v639
    %1121 = vmatpush.msra.mxu0 %v637
    %1122 = vmatmul.f32.gmra.mxu0 %v408
    %v1123 = vpop.f32.mrf.mxu0
    %v1124 = vadd.f32 %v1104, %v1123
    %1125 = vdwg.mxu0
    %1126 = vmatpush.msra.mxu0 %v699
    %1127 = vmatpush.msra.mxu0 %v697
    %1128 = vmatpush.msra.mxu0 %v695
    %1129 = vmatpush.msra.mxu0 %v693
    %1130 = vmatpush.msra.mxu0 %v691
    %1131 = vmatpush.msra.mxu0 %v689
    %1132 = vmatpush.msra.mxu0 %v687
    %1133 = vmatpush.msra.mxu0 %v685
    %1134 = vmatpush.msra.mxu0 %v683
    %1135 = vmatpush.msra.mxu0 %v681
    %1136 = vmatpush.msra.mxu0 %v679
    %1137 = vmatpush.msra.mxu0 %v677
    %1138 = vmatpush.msra.mxu0 %v675
    %1139 = vmatpush.msra.mxu0 %v673
    %1140 = vmatpush.msra.mxu0 %v671
    %1141 = vmatpush.msra.mxu0 %v669
    %1142 = vmatmul.f32.gmra.mxu0 %v409
    %v1143 = vpop.f32.mrf.mxu0
    %v1144 = vadd.f32 %v1124, %v1143
    %1145 = vdwg.mxu0
    %1146 = vmatpush.msra.mxu0 %v731
    %1147 = vmatpush.msra.mxu0 %v729
    %1148 = vmatpush.msra.mxu0 %v727
    %1149 = vmatpush.msra.mxu0 %v725
    %1150 = vmatpush.msra.mxu0 %v723
    %1151 = vmatpush.msra.mxu0 %v721
    %1152 = vmatpush.msra.mxu0 %v719
    %1153 = vmatpush.msra.mxu0 %v717
    %1154 = vmatpush.msra.mxu0 %v715
    %1155 = vmatpush.msra.mxu0 %v713
    %1156 = vmatpush.msra.mxu0 %v711
    %1157 = vmatpush.msra.mxu0 %v709
    %1158 = vmatpush.msra.mxu0 %v707
    %1159 = vmatpush.msra.mxu0 %v705
    %1160 = vmatpush.msra.mxu0 %v703
    %1161 = vmatpush.msra.mxu0 %v701
    %1162 = vmatmul.f32.gmra.mxu0 %v410
    %v1163 = vpop.f32.mrf.mxu0
    %v1164 = vadd.f32 %v1144, %v1163
    %1165 = vdwg.mxu0
    %1166 = vmatpush.msra.mxu0 0.0
    %1167 = vmatpush.msra.mxu0 0.0
    %1168 = vmatpush.msra.mxu0 0.0
    %1169 = vmatpush.msra.mxu0 0.0
    %1170 = vmatpush.msra.mxu0 0.0
    %1171 = vmatpush.msra.mxu0 0.0
    %1172 = vmatpush.msra.mxu0 0.0
    %1173 = vmatpush.msra.mxu0 0.0
    %1174 = vmatpush.msra.mxu0 0.0
    %1175 = vmatpush.msra.mxu0 0.0
    %1176 = vmatpush.msra.mxu0 0.0
    %1177 = vmatpush.msra.mxu0 0.0
    %1178 = vmatpush.msra.mxu0 0.0
    %1179 = vmatpush.msra.mxu0 0.0
    %1180 = vmatpush.msra.mxu0 %v735
    %1181 = vmatpush.msra.mxu0 %v733
    %1182 = vmatmul.f32.gmra.mxu0 %v744
    %v1183 = vpop.f32.mrf.mxu0
    %v1184 = vadd.f32 %v1164, %v1183
    %1185 = vdwg.mxu0
    %v1186 = vmax.f32 %v964, 0.0
    %v1187 = vmax.f32 %v1184, 0.0
    %v1188 = vld [vmem:[%s5] sm:$0xff]
    %v1189 = vld [vmem:[%s5 + $0x8] sm:$0xff]
    %v1190 = vld [vmem:[%s5 + $0x10] sm:$0xff]
    %v1191 = vld [vmem:[%s5 + $0x18] sm:$0xff]
    %v1192 = vld [vmem:[%s5 + $0x20] sm:$0xff]
    %v1193 = vld [vmem:[%s5 + $0x28] sm:$0xff]
    %v1194 = vld [vmem:[%s5 + $0x30] sm:$0xff]
    %v1195 = vld [vmem:[%s5 + $0x38] sm:$0xff]
    %v1196 = vld [vmem:[%s5 + $0x40] sm:$0xff]
    %v1197 = vld [vmem:[%s5 + $0x48] sm:$0xff]
    %v1198 = vld [vmem:[%s5 + $0x50] sm:$0xff]
    %v1199 = vld [vmem:[%s5 + $0x58] sm:$0xff]
    %v1200 = vld [vmem:[%s5 + $0x60] sm:$0xff]
    %v1201 = vld [vmem:[%s5 + $0x68] sm:$0xff]
    %v1202 = vld [vmem:[%s5 + $0x70] sm:$0xff]
    %v1203 = vld [vmem:[%s5 + $0x78] sm:$0xff]
    %v1204 = vld [vmem:[%s5 + $0x80] sm:$0xff]
    %v1205 = vld [vmem:[%s5 + $0x88] sm:$0xff]
    %v1206 = vld [vmem:[%s6] sm:$0x1]
    %v1208 = vperm.slane %v1206, 0
    %v1211 = vsel %vm742, %v1187, 0
    %1213 = vmatpush.msra.mxu0 %v1203
    %1214 = vmatpush.msra.mxu0 %v1202
    %1215 = vmatpush.msra.mxu0 %v1201
    %1216 = vmatpush.msra.mxu0 %v1200
    %1217 = vmatpush.msra.mxu0 %v1199
    %1218 = vmatpush.msra.mxu0 %v1198
    %1219 = vmatpush.msra.mxu0 %v1197
    %1220 = vmatpush.msra.mxu0 %v1196
    %1221 = vmatpush.msra.mxu0 %v1195
    %1222 = vmatpush.msra.mxu0 %v1194
    %1223 = vmatpush.msra.mxu0 %v1193
    %1224 = vmatpush.msra.mxu0 %v1192
    %1225 = vmatpush.msra.mxu0 %v1191
    %1226 = vmatpush.msra.mxu0 %v1190
    %1227 = vmatpush.msra.mxu0 %v1189
    %1228 = vmatpush.msra.mxu0 %v1188
    %1229 = vmatmul.f32.gmra.mxu0 %v1186
    %v1230 = vpop.f32.mrf.mxu0
    %v1231 = vadd.f32 %v1208, %v1230
    %1232 = vdwg.mxu0
    %1233 = vmatpush.msra.mxu0 0.0
    %1234 = vmatpush.msra.mxu0 0.0
    %1235 = vmatpush.msra.mxu0 0.0
    %1236 = vmatpush.msra.mxu0 0.0
    %1237 = vmatpush.msra.mxu0 0.0
    %1238 = vmatpush.msra.mxu0 0.0
    %1239 = vmatpush.msra.mxu0 0.0
    %1240 = vmatpush.msra.mxu0 0.0
    %1241 = vmatpush.msra.mxu0 0.0
    %1242 = vmatpush.msra.mxu0 0.0
    %1243 = vmatpush.msra.mxu0 0.0
    %1244 = vmatpush.msra.mxu0 0.0
    %1245 = vmatpush.msra.mxu0 0.0
    %1246 = vmatpush.msra.mxu0 0.0
    %1247 = vmatpush.msra.mxu0 %v1205
    %1248 = vmatpush.msra.mxu0 %v1204
    %1249 = vmatmul.f32.gmra.mxu0 %v1211
    %v1250 = vpop.f32.mrf.mxu0
    %v1251 = vadd.f32 %v1231, %v1250
    %1252 = vdwg.mxu0
    %v1253 = vmax.f32 %v1251, 0.0
    %v1254 = vld [vmem:[%s7] sm:$0xff]
    %v1255 = vld [vmem:[%s7 + $0x8] sm:$0xff]
    %v1256 = vld [vmem:[%s7 + $0x10] sm:$0xff]
    %v1257 = vld [vmem:[%s7 + $0x18] sm:$0xff]
    %v1258 = vld [vmem:[%s7 + $0x20] sm:$0xff]
    %v1259 = vld [vmem:[%s7 + $0x28] sm:$0xff]
    %v1260 = vld [vmem:[%s7 + $0x30] sm:$0xff]
    %v1261 = vld [vmem:[%s7 + $0x38] sm:$0xff]
    %v1262 = vld [vmem:[%s8] sm:$0x1]
    %v1264 = vperm.slane %v1262, 0
    %vm1266 = vcmask 523264
    %v1268 = vsel %vm1266, %v1253, 0
    %1270 = vmatpush.msra.mxu0 0.0
    %1271 = vmatpush.msra.mxu0 0.0
    %1272 = vmatpush.msra.mxu0 0.0
    %1273 = vmatpush.msra.mxu0 0.0
    %1274 = vmatpush.msra.mxu0 0.0
    %1275 = vmatpush.msra.mxu0 0.0
    %1276 = vmatpush.msra.mxu0 0.0
    %1277 = vmatpush.msra.mxu0 0.0
    %1278 = vmatpush.msra.mxu0 %v1261
    %1279 = vmatpush.msra.mxu0 %v1260
    %1280 = vmatpush.msra.mxu0 %v1259
    %1281 = vmatpush.msra.mxu0 %v1258
    %1282 = vmatpush.msra.mxu0 %v1257
    %1283 = vmatpush.msra.mxu0 %v1256
    %1284 = vmatpush.msra.mxu0 %v1255
    %1285 = vmatpush.msra.mxu0 %v1254
    %1286 = vmatmul.f32.gmra.mxu0 %v1268
    %v1287 = vpop.f32.mrf.mxu0
    %v1288 = vadd.f32 %v1264, %v1287
    %1289 = vdwg.mxu0
    %v1290 = vmax.f32 %v1288, 0.0
    %v1291 = vld [vmem:[%s9] sm:$0xff]
    %v1292 = vld [vmem:[%s9 + $0x8] sm:$0xff]
    %v1293 = vld [vmem:[%s9 + $0x10] sm:$0xff]
    %v1294 = vld [vmem:[%s9 + $0x18] sm:$0xff]
    %v1295 = vld [vmem:[%s10] sm:$0x1]
    %v1297 = vperm.slane %v1295, 0
    %vm1299 = vcmask 261120
    %v1301 = vsel %vm1299, %v1290, 0
    %1303 = vmatpush.msra.mxu0 0.0
    %1304 = vmatpush.msra.mxu0 0.0
    %1305 = vmatpush.msra.mxu0 0.0
    %1306 = vmatpush.msra.mxu0 0.0
    %1307 = vmatpush.msra.mxu0 0.0
    %1308 = vmatpush.msra.mxu0 0.0
    %1309 = vmatpush.msra.mxu0 0.0
    %1310 = vmatpush.msra.mxu0 0.0
    %1311 = vmatpush.msra.mxu0 0.0
    %1312 = vmatpush.msra.mxu0 0.0
    %1313 = vmatpush.msra.mxu0 0.0
    %1314 = vmatpush.msra.mxu0 0.0
    %1315 = vmatpush.msra.mxu0 %v1294
    %1316 = vmatpush.msra.mxu0 %v1293
    %1317 = vmatpush.msra.mxu0 %v1292
    %1318 = vmatpush.msra.mxu0 %v1291
    %1319 = vmatmul.f32.gmra.mxu0 %v1301
    %v1320 = vpop.f32.mrf.mxu0
    %v1321 = vadd.f32 %v1297, %v1320
    %1322 = vdwg.mxu0
    %vm1323 = vcmask 80896
    %1324 = vst.msk [vmem:[#allocation2] sm:$0xff] %vm1323, %v1321
    // Predicated region
    $region46: #{tpu_custom_call.1} parent=1 // pred_check
      _
    $region47: #{tpu_custom_call.1} parent=1 // pred_check_branch
      %1326 = sbr.rel (0) target = $region49
    $region48: #{tpu_custom_call.1} parent=1 // pred_region
      %1328 = vsyncadd [#allocation3], 0
      %s1330 = sshll.u32 [#allocation2], 4
      %s1331 = int_to_ptr.vmem [resolvable:$true] %s1330
      %s1332 = sshll.u32 %s11, 4
      %s1333 = int_to_ptr.hbm [resolvable:$true] %s1332
      %1335 = dma.vmem_to_hbm [thread:$0]  %s1331, 128, %s1333, [#allocation3]
    $region49: #{tpu_custom_call.1} parent=1 // pred_fallthru
      _
    // Predicated region
    $region50: #{tpu_custom_call.1} parent=1 // pred_check
      _
    $region51: #{tpu_custom_call.1} parent=1 // pred_check_branch
      %1337 = sbr.rel (0) target = $region53
    $region52: #{tpu_custom_call.1} parent=1 // pred_region
      %1339 = dma.done [#allocation3], 128
    $region53: #{tpu_custom_call.1} parent=1 // pred_fallthru
      _
    %1340 = vsyncpa [#allocation3], 1

</llo_original>
